<compile_context>
chip_gen: v5e
topology: v5e:2x2
jax: 0.10.0
libtpu: 0.0.40
codegen_flags: <defaults>
</compile_context>

<pallas_src>
import math
import functools

import numpy as np
import jax
import jax.numpy as jnp
from jax.experimental import pallas as pl
from jax.experimental.pallas import tpu as pltpu


# ----------------------------- fused kernel ----------------------------------


def transformer_kernel(x_ref, pe_ref,
                       wqkv_ref, bqkv_ref, wo_ref, bo_ref,
                       ln1w_ref, ln1b_ref,
                       w1_ref, b1_ref, w2_ref, b2_ref,
                       ln2w_ref, ln2b_ref,
                       lin_w_ref, lin_b_ref,
                       o_ref, *, nlayers, nhead, head_dim, scale):
    B, S, D = x_ref.shape
    BS = B * S

    # src * sqrt(d_model) + positional encoding (dropout == identity in eval)
    x = x_ref[...] * scale + pe_ref[...][None]                 # [B, S, D] f32
    x2 = x.reshape(BS, D)                                      # batch -> sublanes

    # causal mask generated in-kernel (0 on/below diag, -inf above), hoisted
    row = jax.lax.broadcasted_iota(jnp.int32, (S, S), 0)
    col = jax.lax.broadcasted_iota(jnp.int32, (S, S), 1)
    mask = jnp.where(row >= col, 0.0, -jnp.inf).astype(jnp.float32)[None]  # [1,S,S]

    inv = 1.0 / math.sqrt(head_dim)

    for l in range(nlayers):                                   # static unroll
        # ---- multi-head self-attention: fused QKV projection -----------------
        qkv = (jnp.dot(x2.astype(jnp.bfloat16), wqkv_ref[l],
                       preferred_element_type=jnp.float32)
               + bqkv_ref[l])                                  # [B*S, 3D] f32
        qkv3 = qkv.reshape(B, S, 3 * D)                        # sublane-tile aligned

        ctx_heads = []
        for h in range(nhead):                                 # static unroll
            q = qkv3[:, :, h * head_dim:(h + 1) * head_dim] * inv
            k = qkv3[:, :, D + h * head_dim:D + (h + 1) * head_dim]
            v = qkv3[:, :, 2 * D + h * head_dim:2 * D + (h + 1) * head_dim]
            s = jnp.einsum('bqd,bkd->bqk',
                           q.astype(jnp.bfloat16), k.astype(jnp.bfloat16),
                           preferred_element_type=jnp.float32) + mask
            m = jnp.max(s, axis=-1, keepdims=True)
            p = jnp.exp(s - m)
            p = p * pl.reciprocal(jnp.sum(p, axis=-1, keepdims=True), approx=True)
            ctx_heads.append(
                jnp.einsum('bqk,bkd->bqd',
                           p.astype(jnp.bfloat16), v.astype(jnp.bfloat16),
                           preferred_element_type=jnp.float32))
        ctx = jnp.concatenate(ctx_heads, axis=-1).reshape(BS, D)   # [B*S, D]

        # single fused output projection
        attn = (jnp.dot(ctx.astype(jnp.bfloat16), wo_ref[l],
                        preferred_element_type=jnp.float32) + bo_ref[l])

        # ---- residual + LayerNorm 1 (post-norm, eps=1e-5, biased var, f32) ---
        x2 = x2 + attn
        mu = jnp.mean(x2, axis=-1, keepdims=True)
        xc = x2 - mu
        var = jnp.mean(xc * xc, axis=-1, keepdims=True)
        x2 = xc * jax.lax.rsqrt(var + 1e-5) * ln1w_ref[l] + ln1b_ref[l]

        # ---- feed-forward (ReLU) + residual + LayerNorm 2 --------------------
        h1 = jnp.maximum(
            jnp.dot(x2.astype(jnp.bfloat16), w1_ref[l],
                    preferred_element_type=jnp.float32) + b1_ref[l], 0.0)
        ff = (jnp.dot(h1.astype(jnp.bfloat16), w2_ref[l],
                      preferred_element_type=jnp.float32) + b2_ref[l])
        x2 = x2 + ff
        mu = jnp.mean(x2, axis=-1, keepdims=True)
        xc = x2 - mu
        var = jnp.mean(xc * xc, axis=-1, keepdims=True)
        x2 = xc * jax.lax.rsqrt(var + 1e-5) * ln2w_ref[l] + ln2b_ref[l]

    # ---- final nn.Linear(d_model, d_model) -----------------------------------
    y = (jnp.dot(x2.astype(jnp.bfloat16), lin_w_ref[...],
                 preferred_element_type=jnp.float32) + lin_b_ref[...])
    o_ref[...] = y.reshape(B, S, D)


# ----------------------------- wrapper ----------------------------------------


def transformer_forward(src_sbd, params, *, d_model, nhead, nlayers):
    S, B, D = src_sbd.shape
    assert D == d_model
    head_dim = d_model // nhead
    x = jnp.transpose(src_sbd, (1, 0, 2))                      # -> [B, S, D]

    inputs = (x, params["pe"],
              params["wqkv"], params["bqkv"], params["wo"], params["bo"],
              params["ln1w"], params["ln1b"],
              params["w1"], params["b1"], params["w2"], params["b2"],
              params["ln2w"], params["ln2b"],
              params["lin_w_t"], params["lin_b"])

    vmem = pl.BlockSpec(memory_space=pltpu.MemorySpace.VMEM)
    out = pl.pallas_call(
        functools.partial(transformer_kernel, nlayers=nlayers, nhead=nhead,
                          head_dim=head_dim, scale=math.sqrt(d_model)),
        in_specs=[vmem] * len(inputs),
        out_specs=vmem,
        out_shape=jax.ShapeDtypeStruct((B, S, D), jnp.float32),
        compiler_params=pltpu.CompilerParams(vmem_limit_bytes=64 << 20),
    )(*inputs)

    return jnp.transpose(out, (1, 0, 2))                       # back to [S, B, D]


# ----------------------- deterministic parameter init -------------------------


def init_params(key, *, d_model, nhead, d_hid, nlayers, seq_len):
    D = d_model

    def unif(k, shape, a=0.1):
        return jax.random.uniform(k, shape, jnp.float32, -a, a)

    wqkv, bqkv, wo, bo = [], [], [], []
    w1, b1, w2, b2 = [], [], [], []
    ln1w, ln1b, ln2w, ln2b = [], [], [], []
    for _ in range(nlayers):
        key, *ks = jax.random.split(key, 13)
        in_proj_w = unif(ks[0], (3 * D, D))          # MHA in_proj_weight [3D, D]
        in_proj_b = unif(ks[1], (3 * D,))
        out_proj_w = unif(ks[2], (D, D))
        out_proj_b = unif(ks[3], (D,))
        w1_l = unif(ks[4], (d_hid, D)); b1_l = unif(ks[5], (d_hid,))
        w2_l = unif(ks[6], (D, d_hid)); b2_l = unif(ks[7], (D,))
        ln1w_l = 1.0 + unif(ks[8], (D,)); ln1b_l = unif(ks[9], (D,))
        ln2w_l = 1.0 + unif(ks[10], (D,)); ln2b_l = unif(ks[11], (D,))

        # fused, pre-transposed weights: x @ W works directly in the kernel
        wqkv.append(in_proj_w.T)                     # [D, 3D] (q | k | v columns)
        bqkv.append(in_proj_b.reshape(1, 3 * D))
        wo.append(out_proj_w.T)                      # [D, D]
        bo.append(out_proj_b.reshape(1, D))
        w1.append(w1_l.T); b1.append(b1_l.reshape(1, d_hid))
        w2.append(w2_l.T); b2.append(b2_l.reshape(1, D))
        ln1w.append(ln1w_l.reshape(1, D)); ln1b.append(ln1b_l.reshape(1, D))
        ln2w.append(ln2w_l.reshape(1, D)); ln2b.append(ln2b_l.reshape(1, D))

    key, k1 = jax.random.split(key)
    lin_w = unif(k1, (D, D))                   # init_weights(): uniform(-0.1, 0.1)
    lin_b = jnp.zeros((1, D), jnp.float32)     # init_weights(): zero bias

    # sinusoidal positional encoding — matches the PyTorch buffer (odd D only)
    position = np.arange(seq_len, dtype=np.float64)[:, None]
    div_term = np.exp(np.arange(0, D, 2, dtype=np.float64) * (-math.log(10000.0) / D))
    pe = np.zeros((seq_len, D), dtype=np.float32)
    pe[:, 0::2] = np.sin(position * div_term)
    pe[:, 1::2] = np.cos(position * div_term)[:, :-1]

    bf16 = jnp.bfloat16
    return dict(
        # matmul weights pre-cast to bf16 (MXU operand dtype); biases/LN stay f32
        wqkv=jnp.stack(wqkv).astype(bf16), bqkv=jnp.stack(bqkv),
        wo=jnp.stack(wo).astype(bf16), bo=jnp.stack(bo),
        w1=jnp.stack(w1).astype(bf16), b1=jnp.stack(b1),
        w2=jnp.stack(w2).astype(bf16), b2=jnp.stack(b2),
        ln1w=jnp.stack(ln1w), ln1b=jnp.stack(ln1b),
        ln2w=jnp.stack(ln2w), ln2b=jnp.stack(ln2b),
        lin_w_t=jnp.asarray(lin_w.T).astype(bf16), lin_b=lin_b,
        pe=jnp.asarray(pe))


# ---------------------------- pure-JAX reference ------------------------------


def _ln(x, w, b, eps=1e-5):
    mu = jnp.mean(x, axis=-1, keepdims=True)
    xc = x - mu
    var = jnp.mean(xc * xc, axis=-1, keepdims=True)
    return xc * jax.lax.rsqrt(var + eps) * w + b


def reference_forward(src_sbd, params, *, d_model, nhead, nlayers):
    D = d_model
    hd = d_model // nhead
    f32 = jnp.float32
    x = jnp.transpose(src_sbd, (1, 0, 2)) * math.sqrt(d_model) + params["pe"][None]
    S = x.shape[1]
    idx = jnp.arange(S)
    mask = jnp.where(idx[:, None] >= idx[None, :], 0.0, -jnp.inf).astype(f32)
    for l in range(nlayers):
        qkv = x @ params["wqkv"][l].astype(f32) + params["bqkv"][l]    # [B, S, 3D]
        ctx = []
        for h in range(nhead):
            q = qkv[..., h * hd:(h + 1) * hd]
            k = qkv[..., D + h * hd:D + (h + 1) * hd]
            v = qkv[..., 2 * D + h * hd:2 * D + (h + 1) * hd]
            s = jnp.einsum("bqe,bke->bqk", q, k) / math.sqrt(hd) + mask
            p = jax.nn.softmax(s, axis=-1)
            ctx.append(jnp.einsum("bqk,bke->bqe", p, v))
        attn = (jnp.concatenate(ctx, axis=-1) @ params["wo"][l].astype(f32)
                + params["bo"][l])
        x = _ln(x + attn, params["ln1w"][l], params["ln1b"][l])
        h1 = jax.nn.relu(x @ params["w1"][l].astype(f32) + params["b1"][l])
        x = _ln(x + h1 @ params["w2"][l].astype(f32) + params["b2"][l],
                params["ln2w"][l], params["ln2b"][l])
    x = x @ params["lin_w_t"].astype(f32) + params["lin_b"]
    return jnp.transpose(x, (1, 0, 2))


# --------------------------------- main ----------------------------------------


if __name__ == "__main__":
    # small, module-consistent shapes (odd d_model required by PositionalEncoding)
    d_model, nhead, d_hid, nlayers = 33, 3, 64, 2
    seq_len, batch = 8, 2

    key = jax.random.PRNGKey(0)
    kp, kx = jax.random.split(key)
    params = init_params(kp, d_model=d_model, nhead=nhead, d_hid=d_hid,
                         nlayers=nlayers, seq_len=seq_len)
    src = jax.random.normal(kx, (seq_len, batch, d_model), jnp.float32)

    out = transformer_forward(src, params, d_model=d_model, nhead=nhead,
                              nlayers=nlayers)
    out = jax.block_until_ready(out)
    assert out.shape == (seq_len, batch, d_model) and out.dtype == jnp.float32

    ref = reference_forward(src, params, d_model=d_model, nhead=nhead,
                            nlayers=nlayers)
    max_err = float(jnp.max(jnp.abs(out - ref)))
    # tolerance accounts for bf16 MXU operands (f32 accumulation) vs pure-f32 ref
    assert jnp.allclose(out, ref, atol=5e-2, rtol=5e-2), f"max_err={max_err}"

    print("KERNEL_OK")
</pallas_src>

<mosaic_0001>
module attributes {stable_mosaic.version = 11 : i64} {
  func.func @transformer_kernel(%arg0: memref<2x8x33xf32, #tpu.memory_space<vmem>>, %arg1: memref<8x33xf32, #tpu.memory_space<vmem>>, %arg2: memref<2x33x99xbf16, #tpu.memory_space<vmem>>, %arg3: memref<2x1x99xf32, #tpu.memory_space<vmem>>, %arg4: memref<2x33x33xbf16, #tpu.memory_space<vmem>>, %arg5: memref<2x1x33xf32, #tpu.memory_space<vmem>>, %arg6: memref<2x1x33xf32, #tpu.memory_space<vmem>>, %arg7: memref<2x1x33xf32, #tpu.memory_space<vmem>>, %arg8: memref<2x33x64xbf16, #tpu.memory_space<vmem>>, %arg9: memref<2x1x64xf32, #tpu.memory_space<vmem>>, %arg10: memref<2x64x33xbf16, #tpu.memory_space<vmem>>, %arg11: memref<2x1x33xf32, #tpu.memory_space<vmem>>, %arg12: memref<2x1x33xf32, #tpu.memory_space<vmem>>, %arg13: memref<2x1x33xf32, #tpu.memory_space<vmem>>, %arg14: memref<33x33xbf16, #tpu.memory_space<vmem>>, %arg15: memref<1x33xf32, #tpu.memory_space<vmem>>, %arg16: memref<2x8x33xf32, #tpu.memory_space<vmem>>) attributes {dimension_semantics = [], scalar_prefetch = 0 : i64, scratch_operands = 0 : i64, tpu.core_type = #tpu.core_type<tc>} {
    %c0 = arith.constant 0 : index
    %c0_0 = arith.constant 0 : index
    %c0_1 = arith.constant 0 : index
    %0 = vector.load %arg0[%c0, %c0_0, %c0_1] : memref<2x8x33xf32, #tpu.memory_space<vmem>>, vector<2x8x33xf32>
    %cst = arith.constant 5.74456263 : f32
    %1 = vector.broadcast %cst : f32 to vector<2x8x33xf32>
    %2 = arith.mulf %0, %1 : vector<2x8x33xf32>
    %c0_2 = arith.constant 0 : index
    %c0_3 = arith.constant 0 : index
    %3 = vector.load %arg1[%c0_2, %c0_3] : memref<8x33xf32, #tpu.memory_space<vmem>>, vector<8x33xf32>
    %4 = vector.shape_cast %3 : vector<8x33xf32> to vector<1x8x33xf32>
    %5 = vector.broadcast %4 : vector<1x8x33xf32> to vector<2x8x33xf32>
    %6 = arith.addf %2, %5 : vector<2x8x33xf32>
    %7 = vector.shape_cast %6 : vector<2x8x33xf32> to vector<16x33xf32>
    %8 = tpu.iota {dimensions = array<i32: 0>} : vector<8x8xi32>
    %9 = tpu.iota {dimensions = array<i32: 1>} : vector<8x8xi32>
    %10 = arith.cmpi sge, %8, %9 : vector<8x8xi32>
    %cst_4 = arith.constant 0.000000e+00 : f32
    %cst_5 = arith.constant 0xFF800000 : f32
    %11 = vector.broadcast %cst_4 : f32 to vector<8x8xf32>
    %12 = vector.broadcast %cst_5 : f32 to vector<8x8xf32>
    %13 = arith.select %10, %11, %12 : vector<8x8xi1>, vector<8x8xf32>
    %14 = vector.shape_cast %13 : vector<8x8xf32> to vector<1x8x8xf32>
    %15 = arith.truncf %7 : vector<16x33xf32> to vector<16x33xbf16>
    %c0_6 = arith.constant 0 : index
    %c0_7 = arith.constant 0 : index
    %c0_8 = arith.constant 0 : index
    %16 = vector.load %arg2[%c0_6, %c0_7, %c0_8] : memref<2x33x99xbf16, #tpu.memory_space<vmem>>, vector<1x33x99xbf16>
    %17 = vector.shape_cast %16 : vector<1x33x99xbf16> to vector<33x99xbf16>
    %cst_9 = arith.constant dense<0.000000e+00> : vector<16x99xf32>
    %18 = tpu.matmul %15, %17, %cst_9 {dimension_numbers = #tpu.dot_dimension_numbers<[1], [0], [0], [1], [0, 0, 1, 1], [], []>} : vector<16x33xbf16>, vector<33x99xbf16>, vector<16x99xf32> -> vector<16x99xf32>
    %c0_10 = arith.constant 0 : index
    %c0_11 = arith.constant 0 : index
    %c0_12 = arith.constant 0 : index
    %19 = vector.load %arg3[%c0_10, %c0_11, %c0_12] : memref<2x1x99xf32, #tpu.memory_space<vmem>>, vector<1x1x99xf32>
    %20 = vector.shape_cast %19 : vector<1x1x99xf32> to vector<1x99xf32>
    %21 = vector.broadcast %20 : vector<1x99xf32> to vector<16x99xf32>
    %22 = arith.addf %18, %21 : vector<16x99xf32>
    %23 = vector.shape_cast %22 : vector<16x99xf32> to vector<2x8x99xf32>
    %24 = vector.extract_strided_slice %23 {offsets = [0, 0, 0], sizes = [2, 8, 11], strides = [1, 1, 1]} : vector<2x8x99xf32> to vector<2x8x11xf32>
    %cst_13 = arith.constant 0.301511347 : f32
    %25 = vector.broadcast %cst_13 : f32 to vector<2x8x11xf32>
    %26 = arith.mulf %24, %25 : vector<2x8x11xf32>
    %27 = vector.extract_strided_slice %23 {offsets = [0, 0, 33], sizes = [2, 8, 11], strides = [1, 1, 1]} : vector<2x8x99xf32> to vector<2x8x11xf32>
    %28 = vector.extract_strided_slice %23 {offsets = [0, 0, 66], sizes = [2, 8, 11], strides = [1, 1, 1]} : vector<2x8x99xf32> to vector<2x8x11xf32>
    %29 = arith.truncf %26 : vector<2x8x11xf32> to vector<2x8x11xbf16>
    %30 = arith.truncf %27 : vector<2x8x11xf32> to vector<2x8x11xbf16>
    "tpu.trace_start"() <{level = 10 : i32, message = "bqd,bkd->bqk"}> : () -> ()
    %cst_14 = arith.constant dense<0.000000e+00> : vector<2x8x8xf32>
    %31 = tpu.matmul %29, %30, %cst_14 {dimension_numbers = #tpu.dot_dimension_numbers<[2], [2], [1], [1], [0, 0, 0, 1, 1, 1], [0], [0]>} : vector<2x8x11xbf16>, vector<2x8x11xbf16>, vector<2x8x8xf32> -> vector<2x8x8xf32>
    "tpu.trace_stop"() : () -> ()
    %32 = vector.broadcast %14 : vector<1x8x8xf32> to vector<2x8x8xf32>
    %33 = arith.addf %31, %32 : vector<2x8x8xf32>
    %cst_15 = arith.constant dense<0xFF800000> : vector<2x8xf32>
    %34 = vector.multi_reduction <maximumf>, %33, %cst_15 [2] : vector<2x8x8xf32> to vector<2x8xf32>
    %35 = vector.shape_cast %34 : vector<2x8xf32> to vector<2x8x1xf32>
    %36 = vector.broadcast %35 : vector<2x8x1xf32> to vector<2x8x8xf32>
    %37 = arith.subf %33, %36 : vector<2x8x8xf32>
    %38 = math.exp %37 : vector<2x8x8xf32>
    %cst_16 = arith.constant dense<0.000000e+00> : vector<2x8xf32>
    %39 = vector.multi_reduction <add>, %38, %cst_16 [2] : vector<2x8x8xf32> to vector<2x8xf32>
    %40 = vector.shape_cast %39 : vector<2x8xf32> to vector<2x8x1xf32>
    %41 = tpu.reciprocal %40 {approx = true} : vector<2x8x1xf32> -> vector<2x8x1xf32>
    %42 = vector.broadcast %41 : vector<2x8x1xf32> to vector<2x8x8xf32>
    %43 = arith.mulf %38, %42 : vector<2x8x8xf32>
    %44 = arith.truncf %43 : vector<2x8x8xf32> to vector<2x8x8xbf16>
    %45 = arith.truncf %28 : vector<2x8x11xf32> to vector<2x8x11xbf16>
    "tpu.trace_start"() <{level = 10 : i32, message = "bqk,bkd->bqd"}> : () -> ()
    %cst_17 = arith.constant dense<0.000000e+00> : vector<2x8x11xf32>
    %46 = tpu.matmul %44, %45, %cst_17 {dimension_numbers = #tpu.dot_dimension_numbers<[2], [1], [1], [2], [0, 0, 0, 1, 1, 2], [0], [0]>} : vector<2x8x8xbf16>, vector<2x8x11xbf16>, vector<2x8x11xf32> -> vector<2x8x11xf32>
    "tpu.trace_stop"() : () -> ()
    %47 = vector.extract_strided_slice %23 {offsets = [0, 0, 11], sizes = [2, 8, 11], strides = [1, 1, 1]} : vector<2x8x99xf32> to vector<2x8x11xf32>
    %cst_18 = arith.constant 0.301511347 : f32
    %48 = vector.broadcast %cst_18 : f32 to vector<2x8x11xf32>
    %49 = arith.mulf %47, %48 : vector<2x8x11xf32>
    %50 = vector.extract_strided_slice %23 {offsets = [0, 0, 44], sizes = [2, 8, 11], strides = [1, 1, 1]} : vector<2x8x99xf32> to vector<2x8x11xf32>
    %51 = vector.extract_strided_slice %23 {offsets = [0, 0, 77], sizes = [2, 8, 11], strides = [1, 1, 1]} : vector<2x8x99xf32> to vector<2x8x11xf32>
    %52 = arith.truncf %49 : vector<2x8x11xf32> to vector<2x8x11xbf16>
    %53 = arith.truncf %50 : vector<2x8x11xf32> to vector<2x8x11xbf16>
    "tpu.trace_start"() <{level = 10 : i32, message = "bqd,bkd->bqk"}> : () -> ()
    %cst_19 = arith.constant dense<0.000000e+00> : vector<2x8x8xf32>
    %54 = tpu.matmul %52, %53, %cst_19 {dimension_numbers = #tpu.dot_dimension_numbers<[2], [2], [1], [1], [0, 0, 0, 1, 1, 1], [0], [0]>} : vector<2x8x11xbf16>, vector<2x8x11xbf16>, vector<2x8x8xf32> -> vector<2x8x8xf32>
    "tpu.trace_stop"() : () -> ()
    %55 = vector.broadcast %14 : vector<1x8x8xf32> to vector<2x8x8xf32>
    %56 = arith.addf %54, %55 : vector<2x8x8xf32>
    %cst_20 = arith.constant dense<0xFF800000> : vector<2x8xf32>
    %57 = vector.multi_reduction <maximumf>, %56, %cst_20 [2] : vector<2x8x8xf32> to vector<2x8xf32>
    %58 = vector.shape_cast %57 : vector<2x8xf32> to vector<2x8x1xf32>
    %59 = vector.broadcast %58 : vector<2x8x1xf32> to vector<2x8x8xf32>
    %60 = arith.subf %56, %59 : vector<2x8x8xf32>
    %61 = math.exp %60 : vector<2x8x8xf32>
    %cst_21 = arith.constant dense<0.000000e+00> : vector<2x8xf32>
    %62 = vector.multi_reduction <add>, %61, %cst_21 [2] : vector<2x8x8xf32> to vector<2x8xf32>
    %63 = vector.shape_cast %62 : vector<2x8xf32> to vector<2x8x1xf32>
    %64 = tpu.reciprocal %63 {approx = true} : vector<2x8x1xf32> -> vector<2x8x1xf32>
    %65 = vector.broadcast %64 : vector<2x8x1xf32> to vector<2x8x8xf32>
    %66 = arith.mulf %61, %65 : vector<2x8x8xf32>
    %67 = arith.truncf %66 : vector<2x8x8xf32> to vector<2x8x8xbf16>
    %68 = arith.truncf %51 : vector<2x8x11xf32> to vector<2x8x11xbf16>
    "tpu.trace_start"() <{level = 10 : i32, message = "bqk,bkd->bqd"}> : () -> ()
    %cst_22 = arith.constant dense<0.000000e+00> : vector<2x8x11xf32>
    %69 = tpu.matmul %67, %68, %cst_22 {dimension_numbers = #tpu.dot_dimension_numbers<[2], [1], [1], [2], [0, 0, 0, 1, 1, 2], [0], [0]>} : vector<2x8x8xbf16>, vector<2x8x11xbf16>, vector<2x8x11xf32> -> vector<2x8x11xf32>
    "tpu.trace_stop"() : () -> ()
    %70 = vector.extract_strided_slice %23 {offsets = [0, 0, 22], sizes = [2, 8, 11], strides = [1, 1, 1]} : vector<2x8x99xf32> to vector<2x8x11xf32>
    %cst_23 = arith.constant 0.301511347 : f32
    %71 = vector.broadcast %cst_23 : f32 to vector<2x8x11xf32>
    %72 = arith.mulf %70, %71 : vector<2x8x11xf32>
    %73 = vector.extract_strided_slice %23 {offsets = [0, 0, 55], sizes = [2, 8, 11], strides = [1, 1, 1]} : vector<2x8x99xf32> to vector<2x8x11xf32>
    %74 = vector.extract_strided_slice %23 {offsets = [0, 0, 88], sizes = [2, 8, 11], strides = [1, 1, 1]} : vector<2x8x99xf32> to vector<2x8x11xf32>
    %75 = arith.truncf %72 : vector<2x8x11xf32> to vector<2x8x11xbf16>
    %76 = arith.truncf %73 : vector<2x8x11xf32> to vector<2x8x11xbf16>
    "tpu.trace_start"() <{level = 10 : i32, message = "bqd,bkd->bqk"}> : () -> ()
    %cst_24 = arith.constant dense<0.000000e+00> : vector<2x8x8xf32>
    %77 = tpu.matmul %75, %76, %cst_24 {dimension_numbers = #tpu.dot_dimension_numbers<[2], [2], [1], [1], [0, 0, 0, 1, 1, 1], [0], [0]>} : vector<2x8x11xbf16>, vector<2x8x11xbf16>, vector<2x8x8xf32> -> vector<2x8x8xf32>
    "tpu.trace_stop"() : () -> ()
    %78 = vector.broadcast %14 : vector<1x8x8xf32> to vector<2x8x8xf32>
    %79 = arith.addf %77, %78 : vector<2x8x8xf32>
    %cst_25 = arith.constant dense<0xFF800000> : vector<2x8xf32>
    %80 = vector.multi_reduction <maximumf>, %79, %cst_25 [2] : vector<2x8x8xf32> to vector<2x8xf32>
    %81 = vector.shape_cast %80 : vector<2x8xf32> to vector<2x8x1xf32>
    %82 = vector.broadcast %81 : vector<2x8x1xf32> to vector<2x8x8xf32>
    %83 = arith.subf %79, %82 : vector<2x8x8xf32>
    %84 = math.exp %83 : vector<2x8x8xf32>
    %cst_26 = arith.constant dense<0.000000e+00> : vector<2x8xf32>
    %85 = vector.multi_reduction <add>, %84, %cst_26 [2] : vector<2x8x8xf32> to vector<2x8xf32>
    %86 = vector.shape_cast %85 : vector<2x8xf32> to vector<2x8x1xf32>
    %87 = tpu.reciprocal %86 {approx = true} : vector<2x8x1xf32> -> vector<2x8x1xf32>
    %88 = vector.broadcast %87 : vector<2x8x1xf32> to vector<2x8x8xf32>
    %89 = arith.mulf %84, %88 : vector<2x8x8xf32>
    %90 = arith.truncf %89 : vector<2x8x8xf32> to vector<2x8x8xbf16>
    %91 = arith.truncf %74 : vector<2x8x11xf32> to vector<2x8x11xbf16>
    "tpu.trace_start"() <{level = 10 : i32, message = "bqk,bkd->bqd"}> : () -> ()
    %cst_27 = arith.constant dense<0.000000e+00> : vector<2x8x11xf32>
    %92 = tpu.matmul %90, %91, %cst_27 {dimension_numbers = #tpu.dot_dimension_numbers<[2], [1], [1], [2], [0, 0, 0, 1, 1, 2], [0], [0]>} : vector<2x8x8xbf16>, vector<2x8x11xbf16>, vector<2x8x11xf32> -> vector<2x8x11xf32>
    "tpu.trace_stop"() : () -> ()
    %93 = tpu.concatenate %46, %69, %92 in 2 : vector<2x8x11xf32>, vector<2x8x11xf32>, vector<2x8x11xf32> -> vector<2x8x33xf32>
    %94 = vector.shape_cast %93 : vector<2x8x33xf32> to vector<16x33xf32>
    %95 = arith.truncf %94 : vector<16x33xf32> to vector<16x33xbf16>
    %c0_28 = arith.constant 0 : index
    %c0_29 = arith.constant 0 : index
    %c0_30 = arith.constant 0 : index
    %96 = vector.load %arg4[%c0_28, %c0_29, %c0_30] : memref<2x33x33xbf16, #tpu.memory_space<vmem>>, vector<1x33x33xbf16>
    %97 = vector.shape_cast %96 : vector<1x33x33xbf16> to vector<33x33xbf16>
    %cst_31 = arith.constant dense<0.000000e+00> : vector<16x33xf32>
    %98 = tpu.matmul %95, %97, %cst_31 {dimension_numbers = #tpu.dot_dimension_numbers<[1], [0], [0], [1], [0, 0, 1, 1], [], []>} : vector<16x33xbf16>, vector<33x33xbf16>, vector<16x33xf32> -> vector<16x33xf32>
    %c0_32 = arith.constant 0 : index
    %c0_33 = arith.constant 0 : index
    %c0_34 = arith.constant 0 : index
    %99 = vector.load %arg5[%c0_32, %c0_33, %c0_34] : memref<2x1x33xf32, #tpu.memory_space<vmem>>, vector<1x1x33xf32>
    %100 = vector.shape_cast %99 : vector<1x1x33xf32> to vector<1x33xf32>
    %101 = vector.broadcast %100 : vector<1x33xf32> to vector<16x33xf32>
    %102 = arith.addf %98, %101 : vector<16x33xf32>
    %103 = arith.addf %7, %102 : vector<16x33xf32>
    %cst_35 = arith.constant dense<0.000000e+00> : vector<16xf32>
    %104 = vector.multi_reduction <add>, %103, %cst_35 [1] : vector<16x33xf32> to vector<16xf32>
    %105 = vector.shape_cast %104 : vector<16xf32> to vector<16x1xf32>
    %cst_36 = arith.constant 3.300000e+01 : f32
    %106 = vector.broadcast %cst_36 : f32 to vector<16x1xf32>
    %107 = arith.divf %105, %106 : vector<16x1xf32>
    %108 = vector.broadcast %107 : vector<16x1xf32> to vector<16x33xf32>
    %109 = arith.subf %103, %108 : vector<16x33xf32>
    %110 = arith.mulf %109, %109 : vector<16x33xf32>
    %cst_37 = arith.constant dense<0.000000e+00> : vector<16xf32>
    %111 = vector.multi_reduction <add>, %110, %cst_37 [1] : vector<16x33xf32> to vector<16xf32>
    %112 = vector.shape_cast %111 : vector<16xf32> to vector<16x1xf32>
    %cst_38 = arith.constant 3.300000e+01 : f32
    %113 = vector.broadcast %cst_38 : f32 to vector<16x1xf32>
    %114 = arith.divf %112, %113 : vector<16x1xf32>
    %cst_39 = arith.constant 9.99999974E-6 : f32
    %115 = vector.broadcast %cst_39 : f32 to vector<16x1xf32>
    %116 = arith.addf %114, %115 : vector<16x1xf32>
    %117 = math.rsqrt %116 : vector<16x1xf32>
    %118 = vector.broadcast %117 : vector<16x1xf32> to vector<16x33xf32>
    %119 = arith.mulf %109, %118 : vector<16x33xf32>
    %c0_40 = arith.constant 0 : index
    %c0_41 = arith.constant 0 : index
    %c0_42 = arith.constant 0 : index
    %120 = vector.load %arg6[%c0_40, %c0_41, %c0_42] : memref<2x1x33xf32, #tpu.memory_space<vmem>>, vector<1x1x33xf32>
    %121 = vector.shape_cast %120 : vector<1x1x33xf32> to vector<1x33xf32>
    %122 = vector.broadcast %121 : vector<1x33xf32> to vector<16x33xf32>
    %123 = arith.mulf %119, %122 : vector<16x33xf32>
    %c0_43 = arith.constant 0 : index
    %c0_44 = arith.constant 0 : index
    %c0_45 = arith.constant 0 : index
    %124 = vector.load %arg7[%c0_43, %c0_44, %c0_45] : memref<2x1x33xf32, #tpu.memory_space<vmem>>, vector<1x1x33xf32>
    %125 = vector.shape_cast %124 : vector<1x1x33xf32> to vector<1x33xf32>
    %126 = vector.broadcast %125 : vector<1x33xf32> to vector<16x33xf32>
    %127 = arith.addf %123, %126 : vector<16x33xf32>
    %128 = arith.truncf %127 : vector<16x33xf32> to vector<16x33xbf16>
    %c0_46 = arith.constant 0 : index
    %c0_47 = arith.constant 0 : index
    %c0_48 = arith.constant 0 : index
    %129 = vector.load %arg8[%c0_46, %c0_47, %c0_48] : memref<2x33x64xbf16, #tpu.memory_space<vmem>>, vector<1x33x64xbf16>
    %130 = vector.shape_cast %129 : vector<1x33x64xbf16> to vector<33x64xbf16>
    %cst_49 = arith.constant dense<0.000000e+00> : vector<16x64xf32>
    %131 = tpu.matmul %128, %130, %cst_49 {dimension_numbers = #tpu.dot_dimension_numbers<[1], [0], [0], [1], [0, 0, 1, 1], [], []>} : vector<16x33xbf16>, vector<33x64xbf16>, vector<16x64xf32> -> vector<16x64xf32>
    %c0_50 = arith.constant 0 : index
    %c0_51 = arith.constant 0 : index
    %c0_52 = arith.constant 0 : index
    %132 = vector.load %arg9[%c0_50, %c0_51, %c0_52] : memref<2x1x64xf32, #tpu.memory_space<vmem>>, vector<1x1x64xf32>
    %133 = vector.shape_cast %132 : vector<1x1x64xf32> to vector<1x64xf32>
    %134 = vector.broadcast %133 : vector<1x64xf32> to vector<16x64xf32>
    %135 = arith.addf %131, %134 : vector<16x64xf32>
    %cst_53 = arith.constant 0.000000e+00 : f32
    %136 = vector.broadcast %cst_53 : f32 to vector<16x64xf32>
    %137 = arith.maximumf %135, %136 : vector<16x64xf32>
    %138 = arith.truncf %137 : vector<16x64xf32> to vector<16x64xbf16>
    %c0_54 = arith.constant 0 : index
    %c0_55 = arith.constant 0 : index
    %c0_56 = arith.constant 0 : index
    %139 = vector.load %arg10[%c0_54, %c0_55, %c0_56] : memref<2x64x33xbf16, #tpu.memory_space<vmem>>, vector<1x64x33xbf16>
    %140 = vector.shape_cast %139 : vector<1x64x33xbf16> to vector<64x33xbf16>
    %cst_57 = arith.constant dense<0.000000e+00> : vector<16x33xf32>
    %141 = tpu.matmul %138, %140, %cst_57 {dimension_numbers = #tpu.dot_dimension_numbers<[1], [0], [0], [1], [0, 0, 1, 1], [], []>} : vector<16x64xbf16>, vector<64x33xbf16>, vector<16x33xf32> -> vector<16x33xf32>
    %c0_58 = arith.constant 0 : index
    %c0_59 = arith.constant 0 : index
    %c0_60 = arith.constant 0 : index
    %142 = vector.load %arg11[%c0_58, %c0_59, %c0_60] : memref<2x1x33xf32, #tpu.memory_space<vmem>>, vector<1x1x33xf32>
    %143 = vector.shape_cast %142 : vector<1x1x33xf32> to vector<1x33xf32>
    %144 = vector.broadcast %143 : vector<1x33xf32> to vector<16x33xf32>
    %145 = arith.addf %141, %144 : vector<16x33xf32>
    %146 = arith.addf %127, %145 : vector<16x33xf32>
    %cst_61 = arith.constant dense<0.000000e+00> : vector<16xf32>
    %147 = vector.multi_reduction <add>, %146, %cst_61 [1] : vector<16x33xf32> to vector<16xf32>
    %148 = vector.shape_cast %147 : vector<16xf32> to vector<16x1xf32>
    %cst_62 = arith.constant 3.300000e+01 : f32
    %149 = vector.broadcast %cst_62 : f32 to vector<16x1xf32>
    %150 = arith.divf %148, %149 : vector<16x1xf32>
    %151 = vector.broadcast %150 : vector<16x1xf32> to vector<16x33xf32>
    %152 = arith.subf %146, %151 : vector<16x33xf32>
    %153 = arith.mulf %152, %152 : vector<16x33xf32>
    %cst_63 = arith.constant dense<0.000000e+00> : vector<16xf32>
    %154 = vector.multi_reduction <add>, %153, %cst_63 [1] : vector<16x33xf32> to vector<16xf32>
    %155 = vector.shape_cast %154 : vector<16xf32> to vector<16x1xf32>
    %cst_64 = arith.constant 3.300000e+01 : f32
    %156 = vector.broadcast %cst_64 : f32 to vector<16x1xf32>
    %157 = arith.divf %155, %156 : vector<16x1xf32>
    %cst_65 = arith.constant 9.99999974E-6 : f32
    %158 = vector.broadcast %cst_65 : f32 to vector<16x1xf32>
    %159 = arith.addf %157, %158 : vector<16x1xf32>
    %160 = math.rsqrt %159 : vector<16x1xf32>
    %161 = vector.broadcast %160 : vector<16x1xf32> to vector<16x33xf32>
    %162 = arith.mulf %152, %161 : vector<16x33xf32>
    %c0_66 = arith.constant 0 : index
    %c0_67 = arith.constant 0 : index
    %c0_68 = arith.constant 0 : index
    %163 = vector.load %arg12[%c0_66, %c0_67, %c0_68] : memref<2x1x33xf32, #tpu.memory_space<vmem>>, vector<1x1x33xf32>
    %164 = vector.shape_cast %163 : vector<1x1x33xf32> to vector<1x33xf32>
    %165 = vector.broadcast %164 : vector<1x33xf32> to vector<16x33xf32>
    %166 = arith.mulf %162, %165 : vector<16x33xf32>
    %c0_69 = arith.constant 0 : index
    %c0_70 = arith.constant 0 : index
    %c0_71 = arith.constant 0 : index
    %167 = vector.load %arg13[%c0_69, %c0_70, %c0_71] : memref<2x1x33xf32, #tpu.memory_space<vmem>>, vector<1x1x33xf32>
    %168 = vector.shape_cast %167 : vector<1x1x33xf32> to vector<1x33xf32>
    %169 = vector.broadcast %168 : vector<1x33xf32> to vector<16x33xf32>
    %170 = arith.addf %166, %169 : vector<16x33xf32>
    %171 = arith.truncf %170 : vector<16x33xf32> to vector<16x33xbf16>
    %c1 = arith.constant 1 : index
    %c0_72 = arith.constant 0 : index
    %c0_73 = arith.constant 0 : index
    %172 = vector.load %arg2[%c1, %c0_72, %c0_73] : memref<2x33x99xbf16, #tpu.memory_space<vmem>>, vector<1x33x99xbf16>
    %173 = vector.shape_cast %172 : vector<1x33x99xbf16> to vector<33x99xbf16>
    %cst_74 = arith.constant dense<0.000000e+00> : vector<16x99xf32>
    %174 = tpu.matmul %171, %173, %cst_74 {dimension_numbers = #tpu.dot_dimension_numbers<[1], [0], [0], [1], [0, 0, 1, 1], [], []>} : vector<16x33xbf16>, vector<33x99xbf16>, vector<16x99xf32> -> vector<16x99xf32>
    %c1_75 = arith.constant 1 : index
    %c0_76 = arith.constant 0 : index
    %c0_77 = arith.constant 0 : index
    %175 = vector.load %arg3[%c1_75, %c0_76, %c0_77] : memref<2x1x99xf32, #tpu.memory_space<vmem>>, vector<1x1x99xf32>
    %176 = vector.shape_cast %175 : vector<1x1x99xf32> to vector<1x99xf32>
    %177 = vector.broadcast %176 : vector<1x99xf32> to vector<16x99xf32>
    %178 = arith.addf %174, %177 : vector<16x99xf32>
    %179 = vector.shape_cast %178 : vector<16x99xf32> to vector<2x8x99xf32>
    %180 = vector.extract_strided_slice %179 {offsets = [0, 0, 0], sizes = [2, 8, 11], strides = [1, 1, 1]} : vector<2x8x99xf32> to vector<2x8x11xf32>
    %cst_78 = arith.constant 0.301511347 : f32
    %181 = vector.broadcast %cst_78 : f32 to vector<2x8x11xf32>
    %182 = arith.mulf %180, %181 : vector<2x8x11xf32>
    %183 = vector.extract_strided_slice %179 {offsets = [0, 0, 33], sizes = [2, 8, 11], strides = [1, 1, 1]} : vector<2x8x99xf32> to vector<2x8x11xf32>
    %184 = vector.extract_strided_slice %179 {offsets = [0, 0, 66], sizes = [2, 8, 11], strides = [1, 1, 1]} : vector<2x8x99xf32> to vector<2x8x11xf32>
    %185 = arith.truncf %182 : vector<2x8x11xf32> to vector<2x8x11xbf16>
    %186 = arith.truncf %183 : vector<2x8x11xf32> to vector<2x8x11xbf16>
    "tpu.trace_start"() <{level = 10 : i32, message = "bqd,bkd->bqk"}> : () -> ()
    %cst_79 = arith.constant dense<0.000000e+00> : vector<2x8x8xf32>
    %187 = tpu.matmul %185, %186, %cst_79 {dimension_numbers = #tpu.dot_dimension_numbers<[2], [2], [1], [1], [0, 0, 0, 1, 1, 1], [0], [0]>} : vector<2x8x11xbf16>, vector<2x8x11xbf16>, vector<2x8x8xf32> -> vector<2x8x8xf32>
    "tpu.trace_stop"() : () -> ()
    %188 = vector.broadcast %14 : vector<1x8x8xf32> to vector<2x8x8xf32>
    %189 = arith.addf %187, %188 : vector<2x8x8xf32>
    %cst_80 = arith.constant dense<0xFF800000> : vector<2x8xf32>
    %190 = vector.multi_reduction <maximumf>, %189, %cst_80 [2] : vector<2x8x8xf32> to vector<2x8xf32>
    %191 = vector.shape_cast %190 : vector<2x8xf32> to vector<2x8x1xf32>
    %192 = vector.broadcast %191 : vector<2x8x1xf32> to vector<2x8x8xf32>
    %193 = arith.subf %189, %192 : vector<2x8x8xf32>
    %194 = math.exp %193 : vector<2x8x8xf32>
    %cst_81 = arith.constant dense<0.000000e+00> : vector<2x8xf32>
    %195 = vector.multi_reduction <add>, %194, %cst_81 [2] : vector<2x8x8xf32> to vector<2x8xf32>
    %196 = vector.shape_cast %195 : vector<2x8xf32> to vector<2x8x1xf32>
    %197 = tpu.reciprocal %196 {approx = true} : vector<2x8x1xf32> -> vector<2x8x1xf32>
    %198 = vector.broadcast %197 : vector<2x8x1xf32> to vector<2x8x8xf32>
    %199 = arith.mulf %194, %198 : vector<2x8x8xf32>
    %200 = arith.truncf %199 : vector<2x8x8xf32> to vector<2x8x8xbf16>
    %201 = arith.truncf %184 : vector<2x8x11xf32> to vector<2x8x11xbf16>
    "tpu.trace_start"() <{level = 10 : i32, message = "bqk,bkd->bqd"}> : () -> ()
    %cst_82 = arith.constant dense<0.000000e+00> : vector<2x8x11xf32>
    %202 = tpu.matmul %200, %201, %cst_82 {dimension_numbers = #tpu.dot_dimension_numbers<[2], [1], [1], [2], [0, 0, 0, 1, 1, 2], [0], [0]>} : vector<2x8x8xbf16>, vector<2x8x11xbf16>, vector<2x8x11xf32> -> vector<2x8x11xf32>
    "tpu.trace_stop"() : () -> ()
    %203 = vector.extract_strided_slice %179 {offsets = [0, 0, 11], sizes = [2, 8, 11], strides = [1, 1, 1]} : vector<2x8x99xf32> to vector<2x8x11xf32>
    %cst_83 = arith.constant 0.301511347 : f32
    %204 = vector.broadcast %cst_83 : f32 to vector<2x8x11xf32>
    %205 = arith.mulf %203, %204 : vector<2x8x11xf32>
    %206 = vector.extract_strided_slice %179 {offsets = [0, 0, 44], sizes = [2, 8, 11], strides = [1, 1, 1]} : vector<2x8x99xf32> to vector<2x8x11xf32>
    %207 = vector.extract_strided_slice %179 {offsets = [0, 0, 77], sizes = [2, 8, 11], strides = [1, 1, 1]} : vector<2x8x99xf32> to vector<2x8x11xf32>
    %208 = arith.truncf %205 : vector<2x8x11xf32> to vector<2x8x11xbf16>
    %209 = arith.truncf %206 : vector<2x8x11xf32> to vector<2x8x11xbf16>
    "tpu.trace_start"() <{level = 10 : i32, message = "bqd,bkd->bqk"}> : () -> ()
    %cst_84 = arith.constant dense<0.000000e+00> : vector<2x8x8xf32>
    %210 = tpu.matmul %208, %209, %cst_84 {dimension_numbers = #tpu.dot_dimension_numbers<[2], [2], [1], [1], [0, 0, 0, 1, 1, 1], [0], [0]>} : vector<2x8x11xbf16>, vector<2x8x11xbf16>, vector<2x8x8xf32> -> vector<2x8x8xf32>
    "tpu.trace_stop"() : () -> ()
    %211 = vector.broadcast %14 : vector<1x8x8xf32> to vector<2x8x8xf32>
    %212 = arith.addf %210, %211 : vector<2x8x8xf32>
    %cst_85 = arith.constant dense<0xFF800000> : vector<2x8xf32>
    %213 = vector.multi_reduction <maximumf>, %212, %cst_85 [2] : vector<2x8x8xf32> to vector<2x8xf32>
    %214 = vector.shape_cast %213 : vector<2x8xf32> to vector<2x8x1xf32>
    %215 = vector.broadcast %214 : vector<2x8x1xf32> to vector<2x8x8xf32>
    %216 = arith.subf %212, %215 : vector<2x8x8xf32>
    %217 = math.exp %216 : vector<2x8x8xf32>
    %cst_86 = arith.constant dense<0.000000e+00> : vector<2x8xf32>
    %218 = vector.multi_reduction <add>, %217, %cst_86 [2] : vector<2x8x8xf32> to vector<2x8xf32>
    %219 = vector.shape_cast %218 : vector<2x8xf32> to vector<2x8x1xf32>
    %220 = tpu.reciprocal %219 {approx = true} : vector<2x8x1xf32> -> vector<2x8x1xf32>
    %221 = vector.broadcast %220 : vector<2x8x1xf32> to vector<2x8x8xf32>
    %222 = arith.mulf %217, %221 : vector<2x8x8xf32>
    %223 = arith.truncf %222 : vector<2x8x8xf32> to vector<2x8x8xbf16>
    %224 = arith.truncf %207 : vector<2x8x11xf32> to vector<2x8x11xbf16>
    "tpu.trace_start"() <{level = 10 : i32, message = "bqk,bkd->bqd"}> : () -> ()
    %cst_87 = arith.constant dense<0.000000e+00> : vector<2x8x11xf32>
    %225 = tpu.matmul %223, %224, %cst_87 {dimension_numbers = #tpu.dot_dimension_numbers<[2], [1], [1], [2], [0, 0, 0, 1, 1, 2], [0], [0]>} : vector<2x8x8xbf16>, vector<2x8x11xbf16>, vector<2x8x11xf32> -> vector<2x8x11xf32>
    "tpu.trace_stop"() : () -> ()
    %226 = vector.extract_strided_slice %179 {offsets = [0, 0, 22], sizes = [2, 8, 11], strides = [1, 1, 1]} : vector<2x8x99xf32> to vector<2x8x11xf32>
    %cst_88 = arith.constant 0.301511347 : f32
    %227 = vector.broadcast %cst_88 : f32 to vector<2x8x11xf32>
    %228 = arith.mulf %226, %227 : vector<2x8x11xf32>
    %229 = vector.extract_strided_slice %179 {offsets = [0, 0, 55], sizes = [2, 8, 11], strides = [1, 1, 1]} : vector<2x8x99xf32> to vector<2x8x11xf32>
    %230 = vector.extract_strided_slice %179 {offsets = [0, 0, 88], sizes = [2, 8, 11], strides = [1, 1, 1]} : vector<2x8x99xf32> to vector<2x8x11xf32>
    %231 = arith.truncf %228 : vector<2x8x11xf32> to vector<2x8x11xbf16>
    %232 = arith.truncf %229 : vector<2x8x11xf32> to vector<2x8x11xbf16>
    "tpu.trace_start"() <{level = 10 : i32, message = "bqd,bkd->bqk"}> : () -> ()
    %cst_89 = arith.constant dense<0.000000e+00> : vector<2x8x8xf32>
    %233 = tpu.matmul %231, %232, %cst_89 {dimension_numbers = #tpu.dot_dimension_numbers<[2], [2], [1], [1], [0, 0, 0, 1, 1, 1], [0], [0]>} : vector<2x8x11xbf16>, vector<2x8x11xbf16>, vector<2x8x8xf32> -> vector<2x8x8xf32>
    "tpu.trace_stop"() : () -> ()
    %234 = vector.broadcast %14 : vector<1x8x8xf32> to vector<2x8x8xf32>
    %235 = arith.addf %233, %234 : vector<2x8x8xf32>
    %cst_90 = arith.constant dense<0xFF800000> : vector<2x8xf32>
    %236 = vector.multi_reduction <maximumf>, %235, %cst_90 [2] : vector<2x8x8xf32> to vector<2x8xf32>
    %237 = vector.shape_cast %236 : vector<2x8xf32> to vector<2x8x1xf32>
    %238 = vector.broadcast %237 : vector<2x8x1xf32> to vector<2x8x8xf32>
    %239 = arith.subf %235, %238 : vector<2x8x8xf32>
    %240 = math.exp %239 : vector<2x8x8xf32>
    %cst_91 = arith.constant dense<0.000000e+00> : vector<2x8xf32>
    %241 = vector.multi_reduction <add>, %240, %cst_91 [2] : vector<2x8x8xf32> to vector<2x8xf32>
    %242 = vector.shape_cast %241 : vector<2x8xf32> to vector<2x8x1xf32>
    %243 = tpu.reciprocal %242 {approx = true} : vector<2x8x1xf32> -> vector<2x8x1xf32>
    %244 = vector.broadcast %243 : vector<2x8x1xf32> to vector<2x8x8xf32>
    %245 = arith.mulf %240, %244 : vector<2x8x8xf32>
    %246 = arith.truncf %245 : vector<2x8x8xf32> to vector<2x8x8xbf16>
    %247 = arith.truncf %230 : vector<2x8x11xf32> to vector<2x8x11xbf16>
    "tpu.trace_start"() <{level = 10 : i32, message = "bqk,bkd->bqd"}> : () -> ()
    %cst_92 = arith.constant dense<0.000000e+00> : vector<2x8x11xf32>
    %248 = tpu.matmul %246, %247, %cst_92 {dimension_numbers = #tpu.dot_dimension_numbers<[2], [1], [1], [2], [0, 0, 0, 1, 1, 2], [0], [0]>} : vector<2x8x8xbf16>, vector<2x8x11xbf16>, vector<2x8x11xf32> -> vector<2x8x11xf32>
    "tpu.trace_stop"() : () -> ()
    %249 = tpu.concatenate %202, %225, %248 in 2 : vector<2x8x11xf32>, vector<2x8x11xf32>, vector<2x8x11xf32> -> vector<2x8x33xf32>
    %250 = vector.shape_cast %249 : vector<2x8x33xf32> to vector<16x33xf32>
    %251 = arith.truncf %250 : vector<16x33xf32> to vector<16x33xbf16>
    %c1_93 = arith.constant 1 : index
    %c0_94 = arith.constant 0 : index
    %c0_95 = arith.constant 0 : index
    %252 = vector.load %arg4[%c1_93, %c0_94, %c0_95] : memref<2x33x33xbf16, #tpu.memory_space<vmem>>, vector<1x33x33xbf16>
    %253 = vector.shape_cast %252 : vector<1x33x33xbf16> to vector<33x33xbf16>
    %cst_96 = arith.constant dense<0.000000e+00> : vector<16x33xf32>
    %254 = tpu.matmul %251, %253, %cst_96 {dimension_numbers = #tpu.dot_dimension_numbers<[1], [0], [0], [1], [0, 0, 1, 1], [], []>} : vector<16x33xbf16>, vector<33x33xbf16>, vector<16x33xf32> -> vector<16x33xf32>
    %c1_97 = arith.constant 1 : index
    %c0_98 = arith.constant 0 : index
    %c0_99 = arith.constant 0 : index
    %255 = vector.load %arg5[%c1_97, %c0_98, %c0_99] : memref<2x1x33xf32, #tpu.memory_space<vmem>>, vector<1x1x33xf32>
    %256 = vector.shape_cast %255 : vector<1x1x33xf32> to vector<1x33xf32>
    %257 = vector.broadcast %256 : vector<1x33xf32> to vector<16x33xf32>
    %258 = arith.addf %254, %257 : vector<16x33xf32>
    %259 = arith.addf %170, %258 : vector<16x33xf32>
    %cst_100 = arith.constant dense<0.000000e+00> : vector<16xf32>
    %260 = vector.multi_reduction <add>, %259, %cst_100 [1] : vector<16x33xf32> to vector<16xf32>
    %261 = vector.shape_cast %260 : vector<16xf32> to vector<16x1xf32>
    %cst_101 = arith.constant 3.300000e+01 : f32
    %262 = vector.broadcast %cst_101 : f32 to vector<16x1xf32>
    %263 = arith.divf %261, %262 : vector<16x1xf32>
    %264 = vector.broadcast %263 : vector<16x1xf32> to vector<16x33xf32>
    %265 = arith.subf %259, %264 : vector<16x33xf32>
    %266 = arith.mulf %265, %265 : vector<16x33xf32>
    %cst_102 = arith.constant dense<0.000000e+00> : vector<16xf32>
    %267 = vector.multi_reduction <add>, %266, %cst_102 [1] : vector<16x33xf32> to vector<16xf32>
    %268 = vector.shape_cast %267 : vector<16xf32> to vector<16x1xf32>
    %cst_103 = arith.constant 3.300000e+01 : f32
    %269 = vector.broadcast %cst_103 : f32 to vector<16x1xf32>
    %270 = arith.divf %268, %269 : vector<16x1xf32>
    %cst_104 = arith.constant 9.99999974E-6 : f32
    %271 = vector.broadcast %cst_104 : f32 to vector<16x1xf32>
    %272 = arith.addf %270, %271 : vector<16x1xf32>
    %273 = math.rsqrt %272 : vector<16x1xf32>
    %274 = vector.broadcast %273 : vector<16x1xf32> to vector<16x33xf32>
    %275 = arith.mulf %265, %274 : vector<16x33xf32>
    %c1_105 = arith.constant 1 : index
    %c0_106 = arith.constant 0 : index
    %c0_107 = arith.constant 0 : index
    %276 = vector.load %arg6[%c1_105, %c0_106, %c0_107] : memref<2x1x33xf32, #tpu.memory_space<vmem>>, vector<1x1x33xf32>
    %277 = vector.shape_cast %276 : vector<1x1x33xf32> to vector<1x33xf32>
    %278 = vector.broadcast %277 : vector<1x33xf32> to vector<16x33xf32>
    %279 = arith.mulf %275, %278 : vector<16x33xf32>
    %c1_108 = arith.constant 1 : index
    %c0_109 = arith.constant 0 : index
    %c0_110 = arith.constant 0 : index
    %280 = vector.load %arg7[%c1_108, %c0_109, %c0_110] : memref<2x1x33xf32, #tpu.memory_space<vmem>>, vector<1x1x33xf32>
    %281 = vector.shape_cast %280 : vector<1x1x33xf32> to vector<1x33xf32>
    %282 = vector.broadcast %281 : vector<1x33xf32> to vector<16x33xf32>
    %283 = arith.addf %279, %282 : vector<16x33xf32>
    %284 = arith.truncf %283 : vector<16x33xf32> to vector<16x33xbf16>
    %c1_111 = arith.constant 1 : index
    %c0_112 = arith.constant 0 : index
    %c0_113 = arith.constant 0 : index
    %285 = vector.load %arg8[%c1_111, %c0_112, %c0_113] : memref<2x33x64xbf16, #tpu.memory_space<vmem>>, vector<1x33x64xbf16>
    %286 = vector.shape_cast %285 : vector<1x33x64xbf16> to vector<33x64xbf16>
    %cst_114 = arith.constant dense<0.000000e+00> : vector<16x64xf32>
    %287 = tpu.matmul %284, %286, %cst_114 {dimension_numbers = #tpu.dot_dimension_numbers<[1], [0], [0], [1], [0, 0, 1, 1], [], []>} : vector<16x33xbf16>, vector<33x64xbf16>, vector<16x64xf32> -> vector<16x64xf32>
    %c1_115 = arith.constant 1 : index
    %c0_116 = arith.constant 0 : index
    %c0_117 = arith.constant 0 : index
    %288 = vector.load %arg9[%c1_115, %c0_116, %c0_117] : memref<2x1x64xf32, #tpu.memory_space<vmem>>, vector<1x1x64xf32>
    %289 = vector.shape_cast %288 : vector<1x1x64xf32> to vector<1x64xf32>
    %290 = vector.broadcast %289 : vector<1x64xf32> to vector<16x64xf32>
    %291 = arith.addf %287, %290 : vector<16x64xf32>
    %cst_118 = arith.constant 0.000000e+00 : f32
    %292 = vector.broadcast %cst_118 : f32 to vector<16x64xf32>
    %293 = arith.maximumf %291, %292 : vector<16x64xf32>
    %294 = arith.truncf %293 : vector<16x64xf32> to vector<16x64xbf16>
    %c1_119 = arith.constant 1 : index
    %c0_120 = arith.constant 0 : index
    %c0_121 = arith.constant 0 : index
    %295 = vector.load %arg10[%c1_119, %c0_120, %c0_121] : memref<2x64x33xbf16, #tpu.memory_space<vmem>>, vector<1x64x33xbf16>
    %296 = vector.shape_cast %295 : vector<1x64x33xbf16> to vector<64x33xbf16>
    %cst_122 = arith.constant dense<0.000000e+00> : vector<16x33xf32>
    %297 = tpu.matmul %294, %296, %cst_122 {dimension_numbers = #tpu.dot_dimension_numbers<[1], [0], [0], [1], [0, 0, 1, 1], [], []>} : vector<16x64xbf16>, vector<64x33xbf16>, vector<16x33xf32> -> vector<16x33xf32>
    %c1_123 = arith.constant 1 : index
    %c0_124 = arith.constant 0 : index
    %c0_125 = arith.constant 0 : index
    %298 = vector.load %arg11[%c1_123, %c0_124, %c0_125] : memref<2x1x33xf32, #tpu.memory_space<vmem>>, vector<1x1x33xf32>
    %299 = vector.shape_cast %298 : vector<1x1x33xf32> to vector<1x33xf32>
    %300 = vector.broadcast %299 : vector<1x33xf32> to vector<16x33xf32>
    %301 = arith.addf %297, %300 : vector<16x33xf32>
    %302 = arith.addf %283, %301 : vector<16x33xf32>
    %cst_126 = arith.constant dense<0.000000e+00> : vector<16xf32>
    %303 = vector.multi_reduction <add>, %302, %cst_126 [1] : vector<16x33xf32> to vector<16xf32>
    %304 = vector.shape_cast %303 : vector<16xf32> to vector<16x1xf32>
    %cst_127 = arith.constant 3.300000e+01 : f32
    %305 = vector.broadcast %cst_127 : f32 to vector<16x1xf32>
    %306 = arith.divf %304, %305 : vector<16x1xf32>
    %307 = vector.broadcast %306 : vector<16x1xf32> to vector<16x33xf32>
    %308 = arith.subf %302, %307 : vector<16x33xf32>
    %309 = arith.mulf %308, %308 : vector<16x33xf32>
    %cst_128 = arith.constant dense<0.000000e+00> : vector<16xf32>
    %310 = vector.multi_reduction <add>, %309, %cst_128 [1] : vector<16x33xf32> to vector<16xf32>
    %311 = vector.shape_cast %310 : vector<16xf32> to vector<16x1xf32>
    %cst_129 = arith.constant 3.300000e+01 : f32
    %312 = vector.broadcast %cst_129 : f32 to vector<16x1xf32>
    %313 = arith.divf %311, %312 : vector<16x1xf32>
    %cst_130 = arith.constant 9.99999974E-6 : f32
    %314 = vector.broadcast %cst_130 : f32 to vector<16x1xf32>
    %315 = arith.addf %313, %314 : vector<16x1xf32>
    %316 = math.rsqrt %315 : vector<16x1xf32>
    %317 = vector.broadcast %316 : vector<16x1xf32> to vector<16x33xf32>
    %318 = arith.mulf %308, %317 : vector<16x33xf32>
    %c1_131 = arith.constant 1 : index
    %c0_132 = arith.constant 0 : index
    %c0_133 = arith.constant 0 : index
    %319 = vector.load %arg12[%c1_131, %c0_132, %c0_133] : memref<2x1x33xf32, #tpu.memory_space<vmem>>, vector<1x1x33xf32>
    %320 = vector.shape_cast %319 : vector<1x1x33xf32> to vector<1x33xf32>
    %321 = vector.broadcast %320 : vector<1x33xf32> to vector<16x33xf32>
    %322 = arith.mulf %318, %321 : vector<16x33xf32>
    %c1_134 = arith.constant 1 : index
    %c0_135 = arith.constant 0 : index
    %c0_136 = arith.constant 0 : index
    %323 = vector.load %arg13[%c1_134, %c0_135, %c0_136] : memref<2x1x33xf32, #tpu.memory_space<vmem>>, vector<1x1x33xf32>
    %324 = vector.shape_cast %323 : vector<1x1x33xf32> to vector<1x33xf32>
    %325 = vector.broadcast %324 : vector<1x33xf32> to vector<16x33xf32>
    %326 = arith.addf %322, %325 : vector<16x33xf32>
    %327 = arith.truncf %326 : vector<16x33xf32> to vector<16x33xbf16>
    %c0_137 = arith.constant 0 : index
    %c0_138 = arith.constant 0 : index
    %328 = vector.load %arg14[%c0_137, %c0_138] : memref<33x33xbf16, #tpu.memory_space<vmem>>, vector<33x33xbf16>
    %cst_139 = arith.constant dense<0.000000e+00> : vector<16x33xf32>
    %329 = tpu.matmul %327, %328, %cst_139 {dimension_numbers = #tpu.dot_dimension_numbers<[1], [0], [0], [1], [0, 0, 1, 1], [], []>} : vector<16x33xbf16>, vector<33x33xbf16>, vector<16x33xf32> -> vector<16x33xf32>
    %c0_140 = arith.constant 0 : index
    %c0_141 = arith.constant 0 : index
    %330 = vector.load %arg15[%c0_140, %c0_141] : memref<1x33xf32, #tpu.memory_space<vmem>>, vector<1x33xf32>
    %331 = vector.broadcast %330 : vector<1x33xf32> to vector<16x33xf32>
    %332 = arith.addf %329, %331 : vector<16x33xf32>
    %333 = vector.shape_cast %332 : vector<16x33xf32> to vector<2x8x33xf32>
    %c0_142 = arith.constant 0 : index
    %c0_143 = arith.constant 0 : index
    %c0_144 = arith.constant 0 : index
    %334 = vector.load %arg16[%c0_142, %c0_143, %c0_144] : memref<2x8x33xf32, #tpu.memory_space<vmem>>, vector<2x8x33xf32>
    tpu.vector_store %arg16[%c0_142, %c0_143, %c0_144], %333 {strides = array<i32>} : memref<2x8x33xf32, #tpu.memory_space<vmem>>, vector<2x8x33xf32>,
    return
  }
}

</mosaic_0001>

<llo_original>
// kernel: tpu_custom_call.1
$region0: #{tpu_custom_call.1}
  #allocation0 [shape = 'u32[]', space=smem, size = 0x4, offset = 0x4, fixed_abs, tag = 'smem constant byte address 0x4 - core index']
  #allocation1 [shape = 'u32[72,128]{1,0:T(1,128)}', space=vmem, size = 0x9000, scoped, tag = 'internal scratch']
  %s0 = inlined_call_operand.vmem [shape: f32[2,8,33], index: 0, kind: input, shape index: {}]
  %s1 = inlined_call_operand.vmem [shape: f32[8,33], index: 1, kind: input, shape index: {}]
  %s2 = inlined_call_operand.vmem [shape: bf16[2,33,99], index: 2, kind: input, shape index: {}]
  %s3 = inlined_call_operand.vmem [shape: f32[2,1,99], index: 3, kind: input, shape index: {}]
  %s4 = inlined_call_operand.vmem [shape: bf16[2,33,33], index: 4, kind: input, shape index: {}]
  %s5 = inlined_call_operand.vmem [shape: f32[2,1,33], index: 5, kind: input, shape index: {}]
  %s6 = inlined_call_operand.vmem [shape: f32[2,1,33], index: 6, kind: input, shape index: {}]
  %s7 = inlined_call_operand.vmem [shape: f32[2,1,33], index: 7, kind: input, shape index: {}]
  %s8 = inlined_call_operand.vmem [shape: bf16[2,33,64], index: 8, kind: input, shape index: {}]
  %s9 = inlined_call_operand.vmem [shape: f32[2,1,64], index: 9, kind: input, shape index: {}]
  %s10 = inlined_call_operand.vmem [shape: bf16[2,64,33], index: 10, kind: input, shape index: {}]
  %s11 = inlined_call_operand.vmem [shape: f32[2,1,33], index: 11, kind: input, shape index: {}]
  %s12 = inlined_call_operand.vmem [shape: f32[2,1,33], index: 12, kind: input, shape index: {}]
  %s13 = inlined_call_operand.vmem [shape: f32[2,1,33], index: 13, kind: input, shape index: {}]
  %s14 = inlined_call_operand.vmem [shape: bf16[33,33], index: 14, kind: input, shape index: {}]
  %s15 = inlined_call_operand.vmem [shape: f32[1,33], index: 15, kind: input, shape index: {}]
  %s16 = inlined_call_operand.hbm [shape: f32[2,8,33], index: 16, kind: output, shape index: {}]
  %s17 = sld [smem:[#allocation0]]
  $region74: #{tpu_custom_call.1} parent=0
    _
  %s19 = ssub.s32 1, %s17
  %s20 = scalar_select 0, %s19, %s17
  $region1: #{tpu_custom_call.1} parent=0
    #allocation2 [shape = 'u8[8192]{0}', space=vmem, size = 0x2000, scoped, tag = 'output window, operand 0, single buffered']
    #allocation3 [shape = 's32[1]{0}', space=sflag, size = 0x4, scoped, tag = 'scoped memory for tpu_custom_call.1']
    %21 = vsyncpa [#allocation3], 0
    // Predicated region
    $region2: #{tpu_custom_call.1} parent=1 // pred_check
      _
    $region3: #{tpu_custom_call.1} parent=1 // pred_check_branch
      %23 = sbr.rel (0) target = $region5
    $region4: #{tpu_custom_call.1} parent=1 // pred_region
      _
    $region5: #{tpu_custom_call.1} parent=1 // pred_fallthru
      _
    // Predicated region
    $region6: #{tpu_custom_call.1} parent=1 // pred_check
      _
    $region7: #{tpu_custom_call.1} parent=1 // pred_check_branch
      %25 = sbr.rel (0) target = $region9
    $region8: #{tpu_custom_call.1} parent=1 // pred_region
      _
    $region9: #{tpu_custom_call.1} parent=1 // pred_fallthru
      _
    // Predicated region
    $region10: #{tpu_custom_call.1} parent=1 // pred_check
      _
    $region11: #{tpu_custom_call.1} parent=1 // pred_check_branch
      %27 = sbr.rel (0) target = $region13
    $region12: #{tpu_custom_call.1} parent=1 // pred_region
      _
    $region13: #{tpu_custom_call.1} parent=1 // pred_fallthru
      _
    // Predicated region
    $region14: #{tpu_custom_call.1} parent=1 // pred_check
      _
    $region15: #{tpu_custom_call.1} parent=1 // pred_check_branch
      %29 = sbr.rel (0) target = $region17
    $region16: #{tpu_custom_call.1} parent=1 // pred_region
      _
    $region17: #{tpu_custom_call.1} parent=1 // pred_fallthru
      _
    // Predicated region
    $region18: #{tpu_custom_call.1} parent=1 // pred_check
      _
    $region19: #{tpu_custom_call.1} parent=1 // pred_check_branch
      %31 = sbr.rel (0) target = $region21
    $region20: #{tpu_custom_call.1} parent=1 // pred_region
      _
    $region21: #{tpu_custom_call.1} parent=1 // pred_fallthru
      _
    // Predicated region
    $region22: #{tpu_custom_call.1} parent=1 // pred_check
      _
    $region23: #{tpu_custom_call.1} parent=1 // pred_check_branch
      %33 = sbr.rel (0) target = $region25
    $region24: #{tpu_custom_call.1} parent=1 // pred_region
      _
    $region25: #{tpu_custom_call.1} parent=1 // pred_fallthru
      _
    // Predicated region
    $region26: #{tpu_custom_call.1} parent=1 // pred_check
      _
    $region27: #{tpu_custom_call.1} parent=1 // pred_check_branch
      %35 = sbr.rel (0) target = $region29
    $region28: #{tpu_custom_call.1} parent=1 // pred_region
      _
    $region29: #{tpu_custom_call.1} parent=1 // pred_fallthru
      _
    // Predicated region
    $region30: #{tpu_custom_call.1} parent=1 // pred_check
      _
    $region31: #{tpu_custom_call.1} parent=1 // pred_check_branch
      %37 = sbr.rel (0) target = $region33
    $region32: #{tpu_custom_call.1} parent=1 // pred_region
      _
    $region33: #{tpu_custom_call.1} parent=1 // pred_fallthru
      _
    // Predicated region
    $region34: #{tpu_custom_call.1} parent=1 // pred_check
      _
    $region35: #{tpu_custom_call.1} parent=1 // pred_check_branch
      %39 = sbr.rel (0) target = $region37
    $region36: #{tpu_custom_call.1} parent=1 // pred_region
      _
    $region37: #{tpu_custom_call.1} parent=1 // pred_fallthru
      _
    // Predicated region
    $region38: #{tpu_custom_call.1} parent=1 // pred_check
      _
    $region39: #{tpu_custom_call.1} parent=1 // pred_check_branch
      %41 = sbr.rel (0) target = $region41
    $region40: #{tpu_custom_call.1} parent=1 // pred_region
      _
    $region41: #{tpu_custom_call.1} parent=1 // pred_fallthru
      _
    // Predicated region
    $region42: #{tpu_custom_call.1} parent=1 // pred_check
      _
    $region43: #{tpu_custom_call.1} parent=1 // pred_check_branch
      %43 = sbr.rel (0) target = $region45
    $region44: #{tpu_custom_call.1} parent=1 // pred_region
      _
    $region45: #{tpu_custom_call.1} parent=1 // pred_fallthru
      _
    // Predicated region
    $region46: #{tpu_custom_call.1} parent=1 // pred_check
      _
    $region47: #{tpu_custom_call.1} parent=1 // pred_check_branch
      %45 = sbr.rel (0) target = $region49
    $region48: #{tpu_custom_call.1} parent=1 // pred_region
      _
    $region49: #{tpu_custom_call.1} parent=1 // pred_fallthru
      _
    // Predicated region
    $region50: #{tpu_custom_call.1} parent=1 // pred_check
      _
    $region51: #{tpu_custom_call.1} parent=1 // pred_check_branch
      %47 = sbr.rel (0) target = $region53
    $region52: #{tpu_custom_call.1} parent=1 // pred_region
      _
    $region53: #{tpu_custom_call.1} parent=1 // pred_fallthru
      _
    // Predicated region
    $region54: #{tpu_custom_call.1} parent=1 // pred_check
      _
    $region55: #{tpu_custom_call.1} parent=1 // pred_check_branch
      %49 = sbr.rel (0) target = $region57
    $region56: #{tpu_custom_call.1} parent=1 // pred_region
      _
    $region57: #{tpu_custom_call.1} parent=1 // pred_fallthru
      _
    // Predicated region
    $region58: #{tpu_custom_call.1} parent=1 // pred_check
      _
    $region59: #{tpu_custom_call.1} parent=1 // pred_check_branch
      %51 = sbr.rel (0) target = $region61
    $region60: #{tpu_custom_call.1} parent=1 // pred_region
      _
    $region61: #{tpu_custom_call.1} parent=1 // pred_fallthru
      _
    // Predicated region
    $region62: #{tpu_custom_call.1} parent=1 // pred_check
      _
    $region63: #{tpu_custom_call.1} parent=1 // pred_check_branch
      %53 = sbr.rel (0) target = $region65
    $region64: #{tpu_custom_call.1} parent=1 // pred_region
      _
    $region65: #{tpu_custom_call.1} parent=1 // pred_fallthru
      _
    %v55 = vld [vmem:[%s0] sm:$0xff]
    %v56 = vld [vmem:[%s0 + $0x8] sm:$0xff]
    %v57 = vmul.f32 %v55, 5.7445626
    %v58 = vmul.f32 %v56, 5.7445626
    %v59 = vld [vmem:[%s1] sm:$0xff]
    %v60 = vadd.f32 %v57, %v59
    %v61 = vadd.f32 %v58, %v59
    %v62 = vlaneseq
    %v63 = vshrl.u32 %v62, 7
    %v64 = vlaneseq
    %v65 = vand.u32 %v64, 127
    %vm66 = vcmp.ge.s32.totalorder %v63, %v65
    %v67 = vsel %vm66, 0.0, -inf
    %v68 = vpack.c.bf16 %v61, %v60
    %v69 = vld [vmem:[%s2] sm:$0xf]
    %v70 = vld [vmem:[%s2 + $0x4] sm:$0xf]
    %v71 = vld [vmem:[%s2 + $0x8] sm:$0xf]
    %v72 = vld [vmem:[%s2 + $0xc] sm:$0xf]
    %v73 = vld [vmem:[%s2 + $0x10] sm:$0x1]
    %v74 = vld [vmem:[%s3] sm:$0x1]
    %v76 = vperm.slane %v74, 0
    %v83 = vunpack.c.l.b16 %v69
    %v84 = vunpack.c.l.b16 %v70
    %v85 = vunpack.c.l.b16 %v71
    %v86 = vunpack.c.l.b16 %v72
    %v87 = vunpack.c.l.b16 %v73
    %v88 = vpack.c.b16 %v84, %v83
    %v89 = vpack.c.b16 %v86, %v85
    %v90 = vpack.c.b16 %v87, %v87
    %vm93 = vcmask 269312
    %v95 = vsel %vm93, %v68, 0
    %vm97 = vcmask 1040384
    %v98 = vsel 0, 4294967295, 65535
    %v99 = vsel %vm97, %v98, 0
    %v101 = vand.u32 %v90, %v99
    %103 = vmatpush.bf16.msra.mxu0 0
    %104 = vmatpush.bf16.msra.mxu0 0
    %105 = vmatpush.bf16.msra.mxu0 0
    %106 = vmatpush.bf16.msra.mxu0 0
    %107 = vmatpush.bf16.msra.mxu0 0
    %108 = vmatpush.bf16.msra.mxu0 %v101
    %109 = vmatpush.bf16.msra.mxu0 %v89
    %110 = vmatpush.bf16.msra.mxu0 %v88
    %111 = vmatmul.bf16.gmra.mxu0 %v95
    %v112 = vpop.f32.mrf.mxu0
    %v113 = vadd.f32 %v76, %v112
    %v114 = vpop.f32.mrf.mxu0
    %v115 = vadd.f32 %v76, %v114
    %116 = vdwg.mxu0
    %v117 = vmul.f32 %v113, 0.30151135
    %v118 = vmul.f32 %v115, 0.30151135
    %v119 = vpack.c.bf16 %v117, %v117
    %v120 = vpack.c.bf16 %v118, %v118
    %v121 = vpack.c.bf16 %v113, %v113
    %v122 = vpack.c.bf16 %v115, %v115
    %v124 = vunpack.c.l.b16 %v121
    %v125 = vpack.c.b16 %v124, %v124
    %126 = vrot.lane.b32.xlu0 %v125, 95
    %v127 = vpop.permute.xlu0 %126
    %vm128 = vcmask 89088
    %v130 = vsel %vm128, %v119, 0
    %v133 = vsel %vm128, %v127, 0
    %135 = vmatpush.bf16.xpose.msra.mxu0 0
    %136 = vmatpush.bf16.xpose.msra.mxu0 0
    %137 = vmatpush.bf16.xpose.msra.mxu0 0
    %138 = vmatpush.bf16.xpose.msra.mxu0 0
    %139 = vmatpush.bf16.xpose.msra.mxu0 0
    %140 = vmatpush.bf16.xpose.msra.mxu0 0
    %141 = vmatpush.bf16.xpose.msra.mxu0 0
    %142 = vmatpush.bf16.xpose.msra.mxu0 %v133
    %143 = vmatmul.bf16.gmra.mxu0 %v130
    %v144 = vpop.f32.mrf.mxu0
    %v145 = vadd.f32 %v67, %v144
    %v146 = vpop.f32.mrf.mxu0
    %147 = vdwg.mxu0
    %v149 = vunpack.c.l.b16 %v122
    %v150 = vpack.c.b16 %v149, %v149
    %151 = vrot.lane.b32.xlu0 %v150, 95
    %v152 = vpop.permute.xlu0 %151
    %v154 = vsel %vm128, %v120, 0
    %v157 = vsel %vm128, %v152, 0
    %159 = vmatpush.bf16.xpose.msra.mxu0 0
    %160 = vmatpush.bf16.xpose.msra.mxu0 0
    %161 = vmatpush.bf16.xpose.msra.mxu0 0
    %162 = vmatpush.bf16.xpose.msra.mxu0 0
    %163 = vmatpush.bf16.xpose.msra.mxu0 0
    %164 = vmatpush.bf16.xpose.msra.mxu0 0
    %165 = vmatpush.bf16.xpose.msra.mxu0 0
    %166 = vmatpush.bf16.xpose.msra.mxu0 %v157
    %167 = vmatmul.bf16.gmra.mxu0 %v154
    %v168 = vpop.f32.mrf.mxu0
    %v169 = vadd.f32 %v67, %v168
    %v170 = vpop.f32.mrf.mxu0
    %171 = vdwg.mxu0
    %vm172 = vcmask 64512
    %v173 = vsel %vm172, %v145, -inf
    %174 = vmax.xlane.f32.xlu0 %v173
    %v175 = vpop.xlane.xlu0 %174
    %v176 = vsel %vm172, %v169, -inf
    %177 = vmax.xlane.f32.xlu0 %v176
    %v178 = vpop.xlane.xlu0 %177
    %v179 = vsub.f32 %v145, %v175
    %v180 = vsub.f32 %v169, %v178
    %v181 = vmul.f32 %v179, 1.442695
    %v182 = vpow.pop %v181
    %v183 = vmul.f32 %v180, 1.442695
    %v184 = vpow.pop %v183
    %v185 = vsel %vm172, %v182, 0.0
    %186 = vadd.xlane.f32.xlu0 %v185
    %v187 = vpop.xlane.xlu0 %186
    %v188 = vsel %vm172, %v184, 0.0
    %189 = vadd.xlane.f32.xlu0 %v188
    %v190 = vpop.xlane.xlu0 %189
    %v191 = vrcp.pop %v187
    %v192 = vrcp.pop %v190
    %v193 = vmul.f32 %v182, %v191
    %v194 = vmul.f32 %v184, %v192
    %v195 = vpack.c.bf16 %v193, %v193
    %v196 = vpack.c.bf16 %v194, %v194
    %197 = vrot.lane.b32.xlu0 %v125, 62
    %v198 = vpop.permute.xlu0 %197
    %v200 = vsel %vm172, %v195, 0
    %vm202 = vcmask 1043456
    %v204 = vsel %vm202, %v198, 0
    %206 = vmatpush.bf16.msra.mxu0 0
    %207 = vmatpush.bf16.msra.mxu0 0
    %208 = vmatpush.bf16.msra.mxu0 0
    %209 = vmatpush.bf16.msra.mxu0 0
    %210 = vmatpush.bf16.msra.mxu0 0
    %211 = vmatpush.bf16.msra.mxu0 0
    %212 = vmatpush.bf16.msra.mxu0 0
    %213 = vmatpush.bf16.msra.mxu0 %v204
    %214 = vmatmul.bf16.gmra.mxu0 %v200
    %v215 = vpop.f32.mrf.mxu0
    %v216 = vadd.f32 0.0, %v215
    %v217 = vpop.f32.mrf.mxu0
    %218 = vdwg.mxu0
    %219 = vrot.lane.b32.xlu0 %v150, 62
    %v220 = vpop.permute.xlu0 %219
    %v222 = vsel %vm172, %v196, 0
    %v225 = vsel %vm202, %v220, 0
    %227 = vmatpush.bf16.msra.mxu0 0
    %228 = vmatpush.bf16.msra.mxu0 0
    %229 = vmatpush.bf16.msra.mxu0 0
    %230 = vmatpush.bf16.msra.mxu0 0
    %231 = vmatpush.bf16.msra.mxu0 0
    %232 = vmatpush.bf16.msra.mxu0 0
    %233 = vmatpush.bf16.msra.mxu0 0
    %234 = vmatpush.bf16.msra.mxu0 %v225
    %235 = vmatmul.bf16.gmra.mxu0 %v222
    %v236 = vpop.f32.mrf.mxu0
    %v237 = vadd.f32 0.0, %v236
    %v238 = vpop.f32.mrf.mxu0
    %239 = vdwg.mxu0
    %v241 = vunpack.c.l.b16 %v119
    %v242 = vpack.c.b16 %v241, %v241
    %243 = vrot.lane.b32.xlu0 %v242, 117
    %v244 = vpop.permute.xlu0 %243
    %245 = vrot.lane.b32.xlu0 %v125, 84
    %v246 = vpop.permute.xlu0 %245
    %v248 = vsel %vm128, %v244, 0
    %v251 = vsel %vm128, %v246, 0
    %253 = vmatpush.bf16.xpose.msra.mxu0 0
    %254 = vmatpush.bf16.xpose.msra.mxu0 0
    %255 = vmatpush.bf16.xpose.msra.mxu0 0
    %256 = vmatpush.bf16.xpose.msra.mxu0 0
    %257 = vmatpush.bf16.xpose.msra.mxu0 0
    %258 = vmatpush.bf16.xpose.msra.mxu0 0
    %259 = vmatpush.bf16.xpose.msra.mxu0 0
    %260 = vmatpush.bf16.xpose.msra.mxu0 %v251
    %261 = vmatmul.bf16.gmra.mxu0 %v248
    %v262 = vpop.f32.mrf.mxu0
    %v263 = vadd.f32 %v67, %v262
    %v264 = vpop.f32.mrf.mxu0
    %265 = vdwg.mxu0
    %v267 = vunpack.c.l.b16 %v120
    %v268 = vpack.c.b16 %v267, %v267
    %269 = vrot.lane.b32.xlu0 %v268, 117
    %v270 = vpop.permute.xlu0 %269
    %271 = vrot.lane.b32.xlu0 %v150, 84
    %v272 = vpop.permute.xlu0 %271
    %v274 = vsel %vm128, %v270, 0
    %v277 = vsel %vm128, %v272, 0
    %279 = vmatpush.bf16.xpose.msra.mxu0 0
    %280 = vmatpush.bf16.xpose.msra.mxu0 0
    %281 = vmatpush.bf16.xpose.msra.mxu0 0
    %282 = vmatpush.bf16.xpose.msra.mxu0 0
    %283 = vmatpush.bf16.xpose.msra.mxu0 0
    %284 = vmatpush.bf16.xpose.msra.mxu0 0
    %285 = vmatpush.bf16.xpose.msra.mxu0 0
    %286 = vmatpush.bf16.xpose.msra.mxu0 %v277
    %287 = vmatmul.bf16.gmra.mxu0 %v274
    %v288 = vpop.f32.mrf.mxu0
    %v289 = vadd.f32 %v67, %v288
    %v290 = vpop.f32.mrf.mxu0
    %291 = vdwg.mxu0
    %v292 = vsel %vm172, %v263, -inf
    %293 = vmax.xlane.f32.xlu0 %v292
    %v294 = vpop.xlane.xlu0 %293
    %v295 = vsel %vm172, %v289, -inf
    %296 = vmax.xlane.f32.xlu0 %v295
    %v297 = vpop.xlane.xlu0 %296
    %v298 = vsub.f32 %v263, %v294
    %v299 = vsub.f32 %v289, %v297
    %v300 = vmul.f32 %v298, 1.442695
    %v301 = vpow.pop %v300
    %v302 = vmul.f32 %v299, 1.442695
    %v303 = vpow.pop %v302
    %v304 = vsel %vm172, %v301, 0.0
    %305 = vadd.xlane.f32.xlu0 %v304
    %v306 = vpop.xlane.xlu0 %305
    %v307 = vsel %vm172, %v303, 0.0
    %308 = vadd.xlane.f32.xlu0 %v307
    %v309 = vpop.xlane.xlu0 %308
    %v310 = vrcp.pop %v306
    %v311 = vrcp.pop %v309
    %v312 = vmul.f32 %v301, %v310
    %v313 = vmul.f32 %v303, %v311
    %v314 = vpack.c.bf16 %v312, %v312
    %v315 = vpack.c.bf16 %v313, %v313
    %316 = vrot.lane.b32.xlu0 %v125, 51
    %v317 = vpop.permute.xlu0 %316
    %v319 = vsel %vm172, %v314, 0
    %v322 = vsel %vm202, %v317, 0
    %324 = vmatpush.bf16.msra.mxu0 0
    %325 = vmatpush.bf16.msra.mxu0 0
    %326 = vmatpush.bf16.msra.mxu0 0
    %327 = vmatpush.bf16.msra.mxu0 0
    %328 = vmatpush.bf16.msra.mxu0 0
    %329 = vmatpush.bf16.msra.mxu0 0
    %330 = vmatpush.bf16.msra.mxu0 0
    %331 = vmatpush.bf16.msra.mxu0 %v322
    %332 = vmatmul.bf16.gmra.mxu0 %v319
    %v333 = vpop.f32.mrf.mxu0
    %v334 = vadd.f32 0.0, %v333
    %v335 = vpop.f32.mrf.mxu0
    %336 = vdwg.mxu0
    %337 = vrot.lane.b32.xlu0 %v150, 51
    %v338 = vpop.permute.xlu0 %337
    %v340 = vsel %vm172, %v315, 0
    %v343 = vsel %vm202, %v338, 0
    %345 = vmatpush.bf16.msra.mxu0 0
    %346 = vmatpush.bf16.msra.mxu0 0
    %347 = vmatpush.bf16.msra.mxu0 0
    %348 = vmatpush.bf16.msra.mxu0 0
    %349 = vmatpush.bf16.msra.mxu0 0
    %350 = vmatpush.bf16.msra.mxu0 0
    %351 = vmatpush.bf16.msra.mxu0 0
    %352 = vmatpush.bf16.msra.mxu0 %v343
    %353 = vmatmul.bf16.gmra.mxu0 %v340
    %v354 = vpop.f32.mrf.mxu0
    %v355 = vadd.f32 0.0, %v354
    %v356 = vpop.f32.mrf.mxu0
    %357 = vdwg.mxu0
    %358 = vrot.lane.b32.xlu0 %v242, 106
    %v359 = vpop.permute.xlu0 %358
    %360 = vrot.lane.b32.xlu0 %v125, 73
    %v361 = vpop.permute.xlu0 %360
    %v363 = vsel %vm128, %v359, 0
    %v366 = vsel %vm128, %v361, 0
    %368 = vmatpush.bf16.xpose.msra.mxu0 0
    %369 = vmatpush.bf16.xpose.msra.mxu0 0
    %370 = vmatpush.bf16.xpose.msra.mxu0 0
    %371 = vmatpush.bf16.xpose.msra.mxu0 0
    %372 = vmatpush.bf16.xpose.msra.mxu0 0
    %373 = vmatpush.bf16.xpose.msra.mxu0 0
    %374 = vmatpush.bf16.xpose.msra.mxu0 0
    %375 = vmatpush.bf16.xpose.msra.mxu0 %v366
    %376 = vmatmul.bf16.gmra.mxu0 %v363
    %v377 = vpop.f32.mrf.mxu0
    %v378 = vadd.f32 %v67, %v377
    %v379 = vpop.f32.mrf.mxu0
    %380 = vdwg.mxu0
    %381 = vrot.lane.b32.xlu0 %v268, 106
    %v382 = vpop.permute.xlu0 %381
    %383 = vrot.lane.b32.xlu0 %v150, 73
    %v384 = vpop.permute.xlu0 %383
    %v386 = vsel %vm128, %v382, 0
    %v389 = vsel %vm128, %v384, 0
    %391 = vmatpush.bf16.xpose.msra.mxu0 0
    %392 = vmatpush.bf16.xpose.msra.mxu0 0
    %393 = vmatpush.bf16.xpose.msra.mxu0 0
    %394 = vmatpush.bf16.xpose.msra.mxu0 0
    %395 = vmatpush.bf16.xpose.msra.mxu0 0
    %396 = vmatpush.bf16.xpose.msra.mxu0 0
    %397 = vmatpush.bf16.xpose.msra.mxu0 0
    %398 = vmatpush.bf16.xpose.msra.mxu0 %v389
    %399 = vmatmul.bf16.gmra.mxu0 %v386
    %v400 = vpop.f32.mrf.mxu0
    %v401 = vadd.f32 %v67, %v400
    %v402 = vpop.f32.mrf.mxu0
    %403 = vdwg.mxu0
    %v404 = vsel %vm172, %v378, -inf
    %405 = vmax.xlane.f32.xlu0 %v404
    %v406 = vpop.xlane.xlu0 %405
    %v407 = vsel %vm172, %v401, -inf
    %408 = vmax.xlane.f32.xlu0 %v407
    %v409 = vpop.xlane.xlu0 %408
    %v410 = vsub.f32 %v378, %v406
    %v411 = vsub.f32 %v401, %v409
    %v412 = vmul.f32 %v410, 1.442695
    %v413 = vpow.pop %v412
    %v414 = vmul.f32 %v411, 1.442695
    %v415 = vpow.pop %v414
    %v416 = vsel %vm172, %v413, 0.0
    %417 = vadd.xlane.f32.xlu0 %v416
    %v418 = vpop.xlane.xlu0 %417
    %v419 = vsel %vm172, %v415, 0.0
    %420 = vadd.xlane.f32.xlu0 %v419
    %v421 = vpop.xlane.xlu0 %420
    %v422 = vrcp.pop %v418
    %v423 = vrcp.pop %v421
    %v424 = vmul.f32 %v413, %v422
    %v425 = vmul.f32 %v415, %v423
    %v426 = vpack.c.bf16 %v424, %v424
    %v427 = vpack.c.bf16 %v425, %v425
    %428 = vrot.lane.b32.xlu0 %v125, 40
    %v429 = vpop.permute.xlu0 %428
    %v431 = vsel %vm172, %v426, 0
    %v434 = vsel %vm202, %v429, 0
    %436 = vmatpush.bf16.msra.mxu0 0
    %437 = vmatpush.bf16.msra.mxu0 0
    %438 = vmatpush.bf16.msra.mxu0 0
    %439 = vmatpush.bf16.msra.mxu0 0
    %440 = vmatpush.bf16.msra.mxu0 0
    %441 = vmatpush.bf16.msra.mxu0 0
    %442 = vmatpush.bf16.msra.mxu0 0
    %443 = vmatpush.bf16.msra.mxu0 %v434
    %444 = vmatmul.bf16.gmra.mxu0 %v431
    %v445 = vpop.f32.mrf.mxu0
    %v446 = vadd.f32 0.0, %v445
    %v447 = vpop.f32.mrf.mxu0
    %448 = vdwg.mxu0
    %449 = vrot.lane.b32.xlu0 %v150, 40
    %v450 = vpop.permute.xlu0 %449
    %v452 = vsel %vm172, %v427, 0
    %v455 = vsel %vm202, %v450, 0
    %457 = vmatpush.bf16.msra.mxu0 0
    %458 = vmatpush.bf16.msra.mxu0 0
    %459 = vmatpush.bf16.msra.mxu0 0
    %460 = vmatpush.bf16.msra.mxu0 0
    %461 = vmatpush.bf16.msra.mxu0 0
    %462 = vmatpush.bf16.msra.mxu0 0
    %463 = vmatpush.bf16.msra.mxu0 0
    %464 = vmatpush.bf16.msra.mxu0 %v455
    %465 = vmatmul.bf16.gmra.mxu0 %v452
    %v466 = vpop.f32.mrf.mxu0
    %v467 = vadd.f32 0.0, %v466
    %v468 = vpop.f32.mrf.mxu0
    %469 = vdwg.mxu0
    %472 = vrot.lane.b32.xlu0 %v334, 11
    %v473 = vpop.permute.xlu0 %472
    %474 = vrot.lane.b32.xlu0 %v355, 11
    %v475 = vpop.permute.xlu0 %474
    %480 = vrot.lane.b32.xlu0 %v446, 22
    %v481 = vpop.permute.xlu0 %480
    %482 = vrot.lane.b32.xlu0 %v467, 22
    %v483 = vpop.permute.xlu0 %482
    %v486 = vsel %vm128, %v216, %v473
    %v487 = vsel %vm128, %v237, %v475
    %vm488 = vcmask 179200
    %v489 = vsel %vm488, %v486, %v481
    %v490 = vsel %vm488, %v487, %v483
    %v491 = vpack.c.bf16 %v490, %v489
    %v492 = vld [vmem:[%s4] sm:$0xf]
    %v493 = vld [vmem:[%s4 + $0x4] sm:$0xf]
    %v494 = vld [vmem:[%s4 + $0x8] sm:$0xf]
    %v495 = vld [vmem:[%s4 + $0xc] sm:$0xf]
    %v496 = vld [vmem:[%s4 + $0x10] sm:$0x1]
    %v497 = vld [vmem:[%s5] sm:$0x1]
    %v499 = vperm.slane %v497, 0
    %v506 = vunpack.c.l.b16 %v492
    %v507 = vunpack.c.l.b16 %v493
    %v508 = vunpack.c.l.b16 %v494
    %v509 = vunpack.c.l.b16 %v495
    %v510 = vunpack.c.l.b16 %v496
    %v511 = vpack.c.b16 %v507, %v506
    %v512 = vpack.c.b16 %v509, %v508
    %v513 = vpack.c.b16 %v510, %v510
    %v517 = vsel %vm93, %v491, 0
    %v520 = vand.u32 %v513, %v99
    %522 = vmatpush.bf16.msra.mxu0 0
    %523 = vmatpush.bf16.msra.mxu0 0
    %524 = vmatpush.bf16.msra.mxu0 0
    %525 = vmatpush.bf16.msra.mxu0 0
    %526 = vmatpush.bf16.msra.mxu0 0
    %527 = vmatpush.bf16.msra.mxu0 %v520
    %528 = vmatpush.bf16.msra.mxu0 %v512
    %529 = vmatpush.bf16.msra.mxu0 %v511
    %530 = vmatmul.bf16.gmra.mxu0 %v517
    %v531 = vpop.f32.mrf.mxu0
    %v532 = vadd.f32 %v499, %v531
    %v533 = vpop.f32.mrf.mxu0
    %v534 = vadd.f32 %v499, %v533
    %535 = vdwg.mxu0
    %v536 = vadd.f32 %v60, %v532
    %v537 = vadd.f32 %v61, %v534
    %v538 = vsel %vm93, %v536, 0.0
    %539 = vadd.xlane.f32.xlu0 %v538
    %v540 = vpop.xlane.xlu0 %539
    %v541 = vsel %vm93, %v537, 0.0
    %542 = vadd.xlane.f32.xlu0 %v541
    %v543 = vpop.xlane.xlu0 %542
    %v544 = vrcp.pop 33.0
    %v545 = vmul.f32 33.0, %v544
    %v546 = vsub.f32 1.0, %v545
    %v547 = vmul.f32 %v544, %v546
    %v548 = vadd.f32 %v544, %v547
    %vm549 = vweird.f32 %v544
    %v550 = vsel %vm549, %v544, %v548
    %v551 = vmul.f32 %v540, %v550
    %v552 = vmul.f32 %v543, %v550
    %v553 = vsub.f32 %v536, %v551
    %v554 = vsub.f32 %v537, %v552
    %v555 = vmul.f32 %v553, %v553
    %v556 = vmul.f32 %v554, %v554
    %v557 = vsel %vm93, %v555, 0.0
    %558 = vadd.xlane.f32.xlu0 %v557
    %v559 = vpop.xlane.xlu0 %558
    %v560 = vsel %vm93, %v556, 0.0
    %561 = vadd.xlane.f32.xlu0 %v560
    %v562 = vpop.xlane.xlu0 %561
    %v563 = vmul.f32 %v559, %v550
    %v564 = vmul.f32 %v562, %v550
    %v565 = vadd.f32 %v563, 1e-05
    %v566 = vadd.f32 %v564, 1e-05
    %v567 = vrsqrt.pop %v565
    %v568 = vmul.f32 %v567, %v565
    %v569 = vmul.f32 %v568, %v567
    %v570 = vmul.f32 0.5, %v569
    %v571 = vsub.f32 1.5, %v570
    %v572 = vmul.f32 %v567, %v571
    %vm573 = vweird.f32 %v565
    %vm574 = vweird.f32 %v567
    %vm575 = vmor %vm573, %vm574
    %v576 = vsel %vm575, %v567, %v572
    %v577 = vrsqrt.pop %v566
    %v578 = vmul.f32 %v577, %v566
    %v579 = vmul.f32 %v578, %v577
    %v580 = vmul.f32 0.5, %v579
    %v581 = vsub.f32 1.5, %v580
    %v582 = vmul.f32 %v577, %v581
    %vm583 = vweird.f32 %v566
    %vm584 = vweird.f32 %v577
    %vm585 = vmor %vm583, %vm584
    %v586 = vsel %vm585, %v577, %v582
    %v587 = vmul.f32 %v553, %v576
    %v588 = vmul.f32 %v554, %v586
    %v589 = vld [vmem:[%s6] sm:$0x1]
    %v591 = vperm.slane %v589, 0
    %v593 = vmul.f32 %v587, %v591
    %v594 = vmul.f32 %v588, %v591
    %v595 = vld [vmem:[%s7] sm:$0x1]
    %v597 = vperm.slane %v595, 0
    %v599 = vadd.f32 %v593, %v597
    %v600 = vadd.f32 %v594, %v597
    %v601 = vpack.c.bf16 %v600, %v599
    %v602 = vld [vmem:[%s8] sm:$0xf]
    %v603 = vld [vmem:[%s8 + $0x4] sm:$0xf]
    %v604 = vld [vmem:[%s8 + $0x8] sm:$0xf]
    %v605 = vld [vmem:[%s8 + $0xc] sm:$0xf]
    %v606 = vld [vmem:[%s8 + $0x10] sm:$0x1]
    %v607 = vld [vmem:[%s9] sm:$0x1]
    %v609 = vperm.slane %v607, 0
    %v616 = vunpack.c.l.b16 %v602
    %v617 = vunpack.c.l.b16 %v603
    %v618 = vunpack.c.l.b16 %v604
    %v619 = vunpack.c.l.b16 %v605
    %v620 = vunpack.c.l.b16 %v606
    %v621 = vpack.c.b16 %v617, %v616
    %v622 = vpack.c.b16 %v619, %v618
    %v623 = vpack.c.b16 %v620, %v620
    %v627 = vsel %vm93, %v601, 0
    %v630 = vand.u32 %v623, %v99
    %632 = vmatpush.bf16.msra.mxu0 0
    %633 = vmatpush.bf16.msra.mxu0 0
    %634 = vmatpush.bf16.msra.mxu0 0
    %635 = vmatpush.bf16.msra.mxu0 0
    %636 = vmatpush.bf16.msra.mxu0 0
    %637 = vmatpush.bf16.msra.mxu0 %v630
    %638 = vmatpush.bf16.msra.mxu0 %v622
    %639 = vmatpush.bf16.msra.mxu0 %v621
    %640 = vmatmul.bf16.gmra.mxu0 %v627
    %v641 = vpop.f32.mrf.mxu0
    %v642 = vadd.f32 %v609, %v641
    %v643 = vpop.f32.mrf.mxu0
    %v644 = vadd.f32 %v609, %v643
    %645 = vdwg.mxu0
    %v646 = vmax.f32 %v642, 0.0
    %v647 = vmax.f32 %v644, 0.0
    %v648 = vpack.c.bf16 %v647, %v646
    %v649 = vld [vmem:[%s10] sm:$0xf]
    %v650 = vld [vmem:[%s10 + $0x4] sm:$0xf]
    %v651 = vld [vmem:[%s10 + $0x8] sm:$0xf]
    %v652 = vld [vmem:[%s10 + $0xc] sm:$0xf]
    %v653 = vld [vmem:[%s10 + $0x10] sm:$0xf]
    %v654 = vld [vmem:[%s10 + $0x14] sm:$0xf]
    %v655 = vld [vmem:[%s10 + $0x18] sm:$0xf]
    %v656 = vld [vmem:[%s10 + $0x1c] sm:$0xf]
    %v657 = vld [vmem:[%s11] sm:$0x1]
    %v659 = vperm.slane %v657, 0
    %v669 = vunpack.c.l.b16 %v649
    %v670 = vunpack.c.l.b16 %v650
    %v671 = vunpack.c.l.b16 %v651
    %v672 = vunpack.c.l.b16 %v652
    %v673 = vunpack.c.l.b16 %v653
    %v674 = vunpack.c.l.b16 %v654
    %v675 = vunpack.c.l.b16 %v655
    %v676 = vunpack.c.l.b16 %v656
    %v677 = vpack.c.b16 %v670, %v669
    %v678 = vpack.c.b16 %v672, %v671
    %v679 = vpack.c.b16 %v674, %v673
    %v680 = vpack.c.b16 %v676, %v675
    %vm685 = vcmask 523264
    %v687 = vsel %vm685, %v648, 0
    %689 = vmatpush.bf16.msra.mxu0 0
    %690 = vmatpush.bf16.msra.mxu0 0
    %691 = vmatpush.bf16.msra.mxu0 0
    %692 = vmatpush.bf16.msra.mxu0 0
    %693 = vmatpush.bf16.msra.mxu0 %v680
    %694 = vmatpush.bf16.msra.mxu0 %v679
    %695 = vmatpush.bf16.msra.mxu0 %v678
    %696 = vmatpush.bf16.msra.mxu0 %v677
    %697 = vmatmul.bf16.gmra.mxu0 %v687
    %v698 = vpop.f32.mrf.mxu0
    %v699 = vadd.f32 %v659, %v698
    %v700 = vpop.f32.mrf.mxu0
    %v701 = vadd.f32 %v659, %v700
    %702 = vdwg.mxu0
    %v703 = vadd.f32 %v599, %v699
    %v704 = vadd.f32 %v600, %v701
    %v705 = vsel %vm93, %v703, 0.0
    %706 = vadd.xlane.f32.xlu0 %v705
    %v707 = vpop.xlane.xlu0 %706
    %v708 = vsel %vm93, %v704, 0.0
    %709 = vadd.xlane.f32.xlu0 %v708
    %v710 = vpop.xlane.xlu0 %709
    %v711 = vmul.f32 %v707, %v550
    %v712 = vmul.f32 %v710, %v550
    %v713 = vsub.f32 %v703, %v711
    %v714 = vsub.f32 %v704, %v712
    %v715 = vmul.f32 %v713, %v713
    %v716 = vmul.f32 %v714, %v714
    %v717 = vsel %vm93, %v715, 0.0
    %718 = vadd.xlane.f32.xlu0 %v717
    %v719 = vpop.xlane.xlu0 %718
    %v720 = vsel %vm93, %v716, 0.0
    %721 = vadd.xlane.f32.xlu0 %v720
    %v722 = vpop.xlane.xlu0 %721
    %v723 = vmul.f32 %v719, %v550
    %v724 = vmul.f32 %v722, %v550
    %v725 = vadd.f32 %v723, 1e-05
    %v726 = vadd.f32 %v724, 1e-05
    %v727 = vrsqrt.pop %v725
    %v728 = vmul.f32 %v727, %v725
    %v729 = vmul.f32 %v728, %v727
    %v730 = vmul.f32 0.5, %v729
    %v731 = vsub.f32 1.5, %v730
    %v732 = vmul.f32 %v727, %v731
    %vm733 = vweird.f32 %v725
    %vm734 = vweird.f32 %v727
    %vm735 = vmor %vm733, %vm734
    %v736 = vsel %vm735, %v727, %v732
    %v737 = vrsqrt.pop %v726
    %v738 = vmul.f32 %v737, %v726
    %v739 = vmul.f32 %v738, %v737
    %v740 = vmul.f32 0.5, %v739
    %v741 = vsub.f32 1.5, %v740
    %v742 = vmul.f32 %v737, %v741
    %vm743 = vweird.f32 %v726
    %vm744 = vweird.f32 %v737
    %vm745 = vmor %vm743, %vm744
    %v746 = vsel %vm745, %v737, %v742
    %v747 = vmul.f32 %v713, %v736
    %v748 = vmul.f32 %v714, %v746
    %v749 = vld [vmem:[%s12] sm:$0x1]
    %v751 = vperm.slane %v749, 0
    %v753 = vmul.f32 %v747, %v751
    %v754 = vmul.f32 %v748, %v751
    %v755 = vld [vmem:[%s13] sm:$0x1]
    %v757 = vperm.slane %v755, 0
    %v759 = vadd.f32 %v753, %v757
    %v760 = vadd.f32 %v754, %v757
    %v761 = vpack.c.bf16 %v760, %v759
    %s762 = scalar_lea.vmem %s2, 20
    %v763 = vld [vmem:[%s762] sm:$0xf]
    %v764 = vld [vmem:[%s762 + $0x4] sm:$0xf]
    %v765 = vld [vmem:[%s762 + $0x8] sm:$0xf]
    %v766 = vld [vmem:[%s762 + $0xc] sm:$0xf]
    %v767 = vld [vmem:[%s762 + $0x10] sm:$0x1]
    %s768 = scalar_lea.vmem %s3, 1
    %v769 = vld [vmem:[%s768] sm:$0x1]
    %v771 = vperm.slane %v769, 0
    %v778 = vunpack.c.l.b16 %v763
    %v779 = vunpack.c.l.b16 %v764
    %v780 = vunpack.c.l.b16 %v765
    %v781 = vunpack.c.l.b16 %v766
    %v782 = vunpack.c.l.b16 %v767
    %v783 = vpack.c.b16 %v779, %v778
    %v784 = vpack.c.b16 %v781, %v780
    %v785 = vpack.c.b16 %v782, %v782
    %v789 = vsel %vm93, %v761, 0
    %v792 = vand.u32 %v785, %v99
    %794 = vmatpush.bf16.msra.mxu0 0
    %795 = vmatpush.bf16.msra.mxu0 0
    %796 = vmatpush.bf16.msra.mxu0 0
    %797 = vmatpush.bf16.msra.mxu0 0
    %798 = vmatpush.bf16.msra.mxu0 0
    %799 = vmatpush.bf16.msra.mxu0 %v792
    %800 = vmatpush.bf16.msra.mxu0 %v784
    %801 = vmatpush.bf16.msra.mxu0 %v783
    %802 = vmatmul.bf16.gmra.mxu0 %v789
    %v803 = vpop.f32.mrf.mxu0
    %v804 = vadd.f32 %v771, %v803
    %v805 = vpop.f32.mrf.mxu0
    %v806 = vadd.f32 %v771, %v805
    %807 = vdwg.mxu0
    %v808 = vmul.f32 %v804, 0.30151135
    %v809 = vmul.f32 %v806, 0.30151135
    %v810 = vpack.c.bf16 %v808, %v808
    %v811 = vpack.c.bf16 %v809, %v809
    %v812 = vpack.c.bf16 %v804, %v804
    %v813 = vpack.c.bf16 %v806, %v806
    %v815 = vunpack.c.l.b16 %v812
    %v816 = vpack.c.b16 %v815, %v815
    %817 = vrot.lane.b32.xlu0 %v816, 95
    %v818 = vpop.permute.xlu0 %817
    %v820 = vsel %vm128, %v810, 0
    %v823 = vsel %vm128, %v818, 0
    %825 = vmatpush.bf16.xpose.msra.mxu0 0
    %826 = vmatpush.bf16.xpose.msra.mxu0 0
    %827 = vmatpush.bf16.xpose.msra.mxu0 0
    %828 = vmatpush.bf16.xpose.msra.mxu0 0
    %829 = vmatpush.bf16.xpose.msra.mxu0 0
    %830 = vmatpush.bf16.xpose.msra.mxu0 0
    %831 = vmatpush.bf16.xpose.msra.mxu0 0
    %832 = vmatpush.bf16.xpose.msra.mxu0 %v823
    %833 = vmatmul.bf16.gmra.mxu0 %v820
    %v834 = vpop.f32.mrf.mxu0
    %v835 = vadd.f32 %v67, %v834
    %v836 = vpop.f32.mrf.mxu0
    %837 = vdwg.mxu0
    %v839 = vunpack.c.l.b16 %v813
    %v840 = vpack.c.b16 %v839, %v839
    %841 = vrot.lane.b32.xlu0 %v840, 95
    %v842 = vpop.permute.xlu0 %841
    %v844 = vsel %vm128, %v811, 0
    %v847 = vsel %vm128, %v842, 0
    %849 = vmatpush.bf16.xpose.msra.mxu0 0
    %850 = vmatpush.bf16.xpose.msra.mxu0 0
    %851 = vmatpush.bf16.xpose.msra.mxu0 0
    %852 = vmatpush.bf16.xpose.msra.mxu0 0
    %853 = vmatpush.bf16.xpose.msra.mxu0 0
    %854 = vmatpush.bf16.xpose.msra.mxu0 0
    %855 = vmatpush.bf16.xpose.msra.mxu0 0
    %856 = vmatpush.bf16.xpose.msra.mxu0 %v847
    %857 = vmatmul.bf16.gmra.mxu0 %v844
    %v858 = vpop.f32.mrf.mxu0
    %v859 = vadd.f32 %v67, %v858
    %v860 = vpop.f32.mrf.mxu0
    %861 = vdwg.mxu0
    %v862 = vsel %vm172, %v835, -inf
    %863 = vmax.xlane.f32.xlu0 %v862
    %v864 = vpop.xlane.xlu0 %863
    %v865 = vsel %vm172, %v859, -inf
    %866 = vmax.xlane.f32.xlu0 %v865
    %v867 = vpop.xlane.xlu0 %866
    %v868 = vsub.f32 %v835, %v864
    %v869 = vsub.f32 %v859, %v867
    %v870 = vmul.f32 %v868, 1.442695
    %v871 = vpow.pop %v870
    %v872 = vmul.f32 %v869, 1.442695
    %v873 = vpow.pop %v872
    %v874 = vsel %vm172, %v871, 0.0
    %875 = vadd.xlane.f32.xlu0 %v874
    %v876 = vpop.xlane.xlu0 %875
    %v877 = vsel %vm172, %v873, 0.0
    %878 = vadd.xlane.f32.xlu0 %v877
    %v879 = vpop.xlane.xlu0 %878
    %v880 = vrcp.pop %v876
    %v881 = vrcp.pop %v879
    %v882 = vmul.f32 %v871, %v880
    %v883 = vmul.f32 %v873, %v881
    %v884 = vpack.c.bf16 %v882, %v882
    %v885 = vpack.c.bf16 %v883, %v883
    %886 = vrot.lane.b32.xlu0 %v816, 62
    %v887 = vpop.permute.xlu0 %886
    %v889 = vsel %vm172, %v884, 0
    %v892 = vsel %vm202, %v887, 0
    %894 = vmatpush.bf16.msra.mxu0 0
    %895 = vmatpush.bf16.msra.mxu0 0
    %896 = vmatpush.bf16.msra.mxu0 0
    %897 = vmatpush.bf16.msra.mxu0 0
    %898 = vmatpush.bf16.msra.mxu0 0
    %899 = vmatpush.bf16.msra.mxu0 0
    %900 = vmatpush.bf16.msra.mxu0 0
    %901 = vmatpush.bf16.msra.mxu0 %v892
    %902 = vmatmul.bf16.gmra.mxu0 %v889
    %v903 = vpop.f32.mrf.mxu0
    %v904 = vadd.f32 0.0, %v903
    %v905 = vpop.f32.mrf.mxu0
    %906 = vdwg.mxu0
    %907 = vrot.lane.b32.xlu0 %v840, 62
    %v908 = vpop.permute.xlu0 %907
    %v910 = vsel %vm172, %v885, 0
    %v913 = vsel %vm202, %v908, 0
    %915 = vmatpush.bf16.msra.mxu0 0
    %916 = vmatpush.bf16.msra.mxu0 0
    %917 = vmatpush.bf16.msra.mxu0 0
    %918 = vmatpush.bf16.msra.mxu0 0
    %919 = vmatpush.bf16.msra.mxu0 0
    %920 = vmatpush.bf16.msra.mxu0 0
    %921 = vmatpush.bf16.msra.mxu0 0
    %922 = vmatpush.bf16.msra.mxu0 %v913
    %923 = vmatmul.bf16.gmra.mxu0 %v910
    %v924 = vpop.f32.mrf.mxu0
    %v925 = vadd.f32 0.0, %v924
    %v926 = vpop.f32.mrf.mxu0
    %927 = vdwg.mxu0
    %v929 = vunpack.c.l.b16 %v810
    %v930 = vpack.c.b16 %v929, %v929
    %931 = vrot.lane.b32.xlu0 %v930, 117
    %v932 = vpop.permute.xlu0 %931
    %933 = vrot.lane.b32.xlu0 %v816, 84
    %v934 = vpop.permute.xlu0 %933
    %v936 = vsel %vm128, %v932, 0
    %v939 = vsel %vm128, %v934, 0
    %941 = vmatpush.bf16.xpose.msra.mxu0 0
    %942 = vmatpush.bf16.xpose.msra.mxu0 0
    %943 = vmatpush.bf16.xpose.msra.mxu0 0
    %944 = vmatpush.bf16.xpose.msra.mxu0 0
    %945 = vmatpush.bf16.xpose.msra.mxu0 0
    %946 = vmatpush.bf16.xpose.msra.mxu0 0
    %947 = vmatpush.bf16.xpose.msra.mxu0 0
    %948 = vmatpush.bf16.xpose.msra.mxu0 %v939
    %949 = vmatmul.bf16.gmra.mxu0 %v936
    %v950 = vpop.f32.mrf.mxu0
    %v951 = vadd.f32 %v67, %v950
    %v952 = vpop.f32.mrf.mxu0
    %953 = vdwg.mxu0
    %v955 = vunpack.c.l.b16 %v811
    %v956 = vpack.c.b16 %v955, %v955
    %957 = vrot.lane.b32.xlu0 %v956, 117
    %v958 = vpop.permute.xlu0 %957
    %959 = vrot.lane.b32.xlu0 %v840, 84
    %v960 = vpop.permute.xlu0 %959
    %v962 = vsel %vm128, %v958, 0
    %v965 = vsel %vm128, %v960, 0
    %967 = vmatpush.bf16.xpose.msra.mxu0 0
    %968 = vmatpush.bf16.xpose.msra.mxu0 0
    %969 = vmatpush.bf16.xpose.msra.mxu0 0
    %970 = vmatpush.bf16.xpose.msra.mxu0 0
    %971 = vmatpush.bf16.xpose.msra.mxu0 0
    %972 = vmatpush.bf16.xpose.msra.mxu0 0
    %973 = vmatpush.bf16.xpose.msra.mxu0 0
    %974 = vmatpush.bf16.xpose.msra.mxu0 %v965
    %975 = vmatmul.bf16.gmra.mxu0 %v962
    %v976 = vpop.f32.mrf.mxu0
    %v977 = vadd.f32 %v67, %v976
    %v978 = vpop.f32.mrf.mxu0
    %979 = vdwg.mxu0
    %v980 = vsel %vm172, %v951, -inf
    %981 = vmax.xlane.f32.xlu0 %v980
    %v982 = vpop.xlane.xlu0 %981
    %v983 = vsel %vm172, %v977, -inf
    %984 = vmax.xlane.f32.xlu0 %v983
    %v985 = vpop.xlane.xlu0 %984
    %v986 = vsub.f32 %v951, %v982
    %v987 = vsub.f32 %v977, %v985
    %v988 = vmul.f32 %v986, 1.442695
    %v989 = vpow.pop %v988
    %v990 = vmul.f32 %v987, 1.442695
    %v991 = vpow.pop %v990
    %v992 = vsel %vm172, %v989, 0.0
    %993 = vadd.xlane.f32.xlu0 %v992
    %v994 = vpop.xlane.xlu0 %993
    %v995 = vsel %vm172, %v991, 0.0
    %996 = vadd.xlane.f32.xlu0 %v995
    %v997 = vpop.xlane.xlu0 %996
    %v998 = vrcp.pop %v994
    %v999 = vrcp.pop %v997
    %v1000 = vmul.f32 %v989, %v998
    %v1001 = vmul.f32 %v991, %v999
    %v1002 = vpack.c.bf16 %v1000, %v1000
    %v1003 = vpack.c.bf16 %v1001, %v1001
    %1004 = vrot.lane.b32.xlu0 %v816, 51
    %v1005 = vpop.permute.xlu0 %1004
    %v1007 = vsel %vm172, %v1002, 0
    %v1010 = vsel %vm202, %v1005, 0
    %1012 = vmatpush.bf16.msra.mxu0 0
    %1013 = vmatpush.bf16.msra.mxu0 0
    %1014 = vmatpush.bf16.msra.mxu0 0
    %1015 = vmatpush.bf16.msra.mxu0 0
    %1016 = vmatpush.bf16.msra.mxu0 0
    %1017 = vmatpush.bf16.msra.mxu0 0
    %1018 = vmatpush.bf16.msra.mxu0 0
    %1019 = vmatpush.bf16.msra.mxu0 %v1010
    %1020 = vmatmul.bf16.gmra.mxu0 %v1007
    %v1021 = vpop.f32.mrf.mxu0
    %v1022 = vadd.f32 0.0, %v1021
    %v1023 = vpop.f32.mrf.mxu0
    %1024 = vdwg.mxu0
    %1025 = vrot.lane.b32.xlu0 %v840, 51
    %v1026 = vpop.permute.xlu0 %1025
    %v1028 = vsel %vm172, %v1003, 0
    %v1031 = vsel %vm202, %v1026, 0
    %1033 = vmatpush.bf16.msra.mxu0 0
    %1034 = vmatpush.bf16.msra.mxu0 0
    %1035 = vmatpush.bf16.msra.mxu0 0
    %1036 = vmatpush.bf16.msra.mxu0 0
    %1037 = vmatpush.bf16.msra.mxu0 0
    %1038 = vmatpush.bf16.msra.mxu0 0
    %1039 = vmatpush.bf16.msra.mxu0 0
    %1040 = vmatpush.bf16.msra.mxu0 %v1031
    %1041 = vmatmul.bf16.gmra.mxu0 %v1028
    %v1042 = vpop.f32.mrf.mxu0
    %v1043 = vadd.f32 0.0, %v1042
    %v1044 = vpop.f32.mrf.mxu0
    %1045 = vdwg.mxu0
    %1046 = vrot.lane.b32.xlu0 %v930, 106
    %v1047 = vpop.permute.xlu0 %1046
    %1048 = vrot.lane.b32.xlu0 %v816, 73
    %v1049 = vpop.permute.xlu0 %1048
    %v1051 = vsel %vm128, %v1047, 0
    %v1054 = vsel %vm128, %v1049, 0
    %1056 = vmatpush.bf16.xpose.msra.mxu0 0
    %1057 = vmatpush.bf16.xpose.msra.mxu0 0
    %1058 = vmatpush.bf16.xpose.msra.mxu0 0
    %1059 = vmatpush.bf16.xpose.msra.mxu0 0
    %1060 = vmatpush.bf16.xpose.msra.mxu0 0
    %1061 = vmatpush.bf16.xpose.msra.mxu0 0
    %1062 = vmatpush.bf16.xpose.msra.mxu0 0
    %1063 = vmatpush.bf16.xpose.msra.mxu0 %v1054
    %1064 = vmatmul.bf16.gmra.mxu0 %v1051
    %v1065 = vpop.f32.mrf.mxu0
    %v1066 = vadd.f32 %v67, %v1065
    %v1067 = vpop.f32.mrf.mxu0
    %1068 = vdwg.mxu0
    %1069 = vrot.lane.b32.xlu0 %v956, 106
    %v1070 = vpop.permute.xlu0 %1069
    %1071 = vrot.lane.b32.xlu0 %v840, 73
    %v1072 = vpop.permute.xlu0 %1071
    %v1074 = vsel %vm128, %v1070, 0
    %v1077 = vsel %vm128, %v1072, 0
    %1079 = vmatpush.bf16.xpose.msra.mxu0 0
    %1080 = vmatpush.bf16.xpose.msra.mxu0 0
    %1081 = vmatpush.bf16.xpose.msra.mxu0 0
    %1082 = vmatpush.bf16.xpose.msra.mxu0 0
    %1083 = vmatpush.bf16.xpose.msra.mxu0 0
    %1084 = vmatpush.bf16.xpose.msra.mxu0 0
    %1085 = vmatpush.bf16.xpose.msra.mxu0 0
    %1086 = vmatpush.bf16.xpose.msra.mxu0 %v1077
    %1087 = vmatmul.bf16.gmra.mxu0 %v1074
    %v1088 = vpop.f32.mrf.mxu0
    %v1089 = vadd.f32 %v67, %v1088
    %v1090 = vpop.f32.mrf.mxu0
    %1091 = vdwg.mxu0
    %v1092 = vsel %vm172, %v1066, -inf
    %1093 = vmax.xlane.f32.xlu0 %v1092
    %v1094 = vpop.xlane.xlu0 %1093
    %v1095 = vsel %vm172, %v1089, -inf
    %1096 = vmax.xlane.f32.xlu0 %v1095
    %v1097 = vpop.xlane.xlu0 %1096
    %v1098 = vsub.f32 %v1066, %v1094
    %v1099 = vsub.f32 %v1089, %v1097
    %v1100 = vmul.f32 %v1098, 1.442695
    %v1101 = vpow.pop %v1100
    %v1102 = vmul.f32 %v1099, 1.442695
    %v1103 = vpow.pop %v1102
    %v1104 = vsel %vm172, %v1101, 0.0
    %1105 = vadd.xlane.f32.xlu0 %v1104
    %v1106 = vpop.xlane.xlu0 %1105
    %v1107 = vsel %vm172, %v1103, 0.0
    %1108 = vadd.xlane.f32.xlu0 %v1107
    %v1109 = vpop.xlane.xlu0 %1108
    %v1110 = vrcp.pop %v1106
    %v1111 = vrcp.pop %v1109
    %v1112 = vmul.f32 %v1101, %v1110
    %v1113 = vmul.f32 %v1103, %v1111
    %v1114 = vpack.c.bf16 %v1112, %v1112
    %v1115 = vpack.c.bf16 %v1113, %v1113
    %1116 = vrot.lane.b32.xlu0 %v816, 40
    %v1117 = vpop.permute.xlu0 %1116
    %v1119 = vsel %vm172, %v1114, 0
    %v1122 = vsel %vm202, %v1117, 0
    %1124 = vmatpush.bf16.msra.mxu0 0
    %1125 = vmatpush.bf16.msra.mxu0 0
    %1126 = vmatpush.bf16.msra.mxu0 0
    %1127 = vmatpush.bf16.msra.mxu0 0
    %1128 = vmatpush.bf16.msra.mxu0 0
    %1129 = vmatpush.bf16.msra.mxu0 0
    %1130 = vmatpush.bf16.msra.mxu0 0
    %1131 = vmatpush.bf16.msra.mxu0 %v1122
    %1132 = vmatmul.bf16.gmra.mxu0 %v1119
    %v1133 = vpop.f32.mrf.mxu0
    %v1134 = vadd.f32 0.0, %v1133
    %v1135 = vpop.f32.mrf.mxu0
    %1136 = vdwg.mxu0
    %1137 = vrot.lane.b32.xlu0 %v840, 40
    %v1138 = vpop.permute.xlu0 %1137
    %v1140 = vsel %vm172, %v1115, 0
    %v1143 = vsel %vm202, %v1138, 0
    %1145 = vmatpush.bf16.msra.mxu0 0
    %1146 = vmatpush.bf16.msra.mxu0 0
    %1147 = vmatpush.bf16.msra.mxu0 0
    %1148 = vmatpush.bf16.msra.mxu0 0
    %1149 = vmatpush.bf16.msra.mxu0 0
    %1150 = vmatpush.bf16.msra.mxu0 0
    %1151 = vmatpush.bf16.msra.mxu0 0
    %1152 = vmatpush.bf16.msra.mxu0 %v1143
    %1153 = vmatmul.bf16.gmra.mxu0 %v1140
    %v1154 = vpop.f32.mrf.mxu0
    %v1155 = vadd.f32 0.0, %v1154
    %v1156 = vpop.f32.mrf.mxu0
    %1157 = vdwg.mxu0
    %1160 = vrot.lane.b32.xlu0 %v1022, 11
    %v1161 = vpop.permute.xlu0 %1160
    %1162 = vrot.lane.b32.xlu0 %v1043, 11
    %v1163 = vpop.permute.xlu0 %1162
    %1168 = vrot.lane.b32.xlu0 %v1134, 22
    %v1169 = vpop.permute.xlu0 %1168
    %1170 = vrot.lane.b32.xlu0 %v1155, 22
    %v1171 = vpop.permute.xlu0 %1170
    %v1174 = vsel %vm128, %v904, %v1161
    %v1175 = vsel %vm128, %v925, %v1163
    %v1176 = vsel %vm488, %v1174, %v1169
    %v1177 = vsel %vm488, %v1175, %v1171
    %v1178 = vpack.c.bf16 %v1177, %v1176
    %s1179 = scalar_lea.vmem %s4, 20
    %v1180 = vld [vmem:[%s1179] sm:$0xf]
    %v1181 = vld [vmem:[%s1179 + $0x4] sm:$0xf]
    %v1182 = vld [vmem:[%s1179 + $0x8] sm:$0xf]
    %v1183 = vld [vmem:[%s1179 + $0xc] sm:$0xf]
    %v1184 = vld [vmem:[%s1179 + $0x10] sm:$0x1]
    %s1185 = scalar_lea.vmem %s5, 1
    %v1186 = vld [vmem:[%s1185] sm:$0x1]
    %v1188 = vperm.slane %v1186, 0
    %v1195 = vunpack.c.l.b16 %v1180
    %v1196 = vunpack.c.l.b16 %v1181
    %v1197 = vunpack.c.l.b16 %v1182
    %v1198 = vunpack.c.l.b16 %v1183
    %v1199 = vunpack.c.l.b16 %v1184
    %v1200 = vpack.c.b16 %v1196, %v1195
    %v1201 = vpack.c.b16 %v1198, %v1197
    %v1202 = vpack.c.b16 %v1199, %v1199
    %v1206 = vsel %vm93, %v1178, 0
    %v1209 = vand.u32 %v1202, %v99
    %1211 = vmatpush.bf16.msra.mxu0 0
    %1212 = vmatpush.bf16.msra.mxu0 0
    %1213 = vmatpush.bf16.msra.mxu0 0
    %1214 = vmatpush.bf16.msra.mxu0 0
    %1215 = vmatpush.bf16.msra.mxu0 0
    %1216 = vmatpush.bf16.msra.mxu0 %v1209
    %1217 = vmatpush.bf16.msra.mxu0 %v1201
    %1218 = vmatpush.bf16.msra.mxu0 %v1200
    %1219 = vmatmul.bf16.gmra.mxu0 %v1206
    %v1220 = vpop.f32.mrf.mxu0
    %v1221 = vadd.f32 %v1188, %v1220
    %v1222 = vpop.f32.mrf.mxu0
    %v1223 = vadd.f32 %v1188, %v1222
    %1224 = vdwg.mxu0
    %v1225 = vadd.f32 %v759, %v1221
    %v1226 = vadd.f32 %v760, %v1223
    %v1227 = vsel %vm93, %v1225, 0.0
    %1228 = vadd.xlane.f32.xlu0 %v1227
    %v1229 = vpop.xlane.xlu0 %1228
    %v1230 = vsel %vm93, %v1226, 0.0
    %1231 = vadd.xlane.f32.xlu0 %v1230
    %v1232 = vpop.xlane.xlu0 %1231
    %v1233 = vmul.f32 %v1229, %v550
    %v1234 = vmul.f32 %v1232, %v550
    %v1235 = vsub.f32 %v1225, %v1233
    %v1236 = vsub.f32 %v1226, %v1234
    %v1237 = vmul.f32 %v1235, %v1235
    %v1238 = vmul.f32 %v1236, %v1236
    %v1239 = vsel %vm93, %v1237, 0.0
    %1240 = vadd.xlane.f32.xlu0 %v1239
    %v1241 = vpop.xlane.xlu0 %1240
    %v1242 = vsel %vm93, %v1238, 0.0
    %1243 = vadd.xlane.f32.xlu0 %v1242
    %v1244 = vpop.xlane.xlu0 %1243
    %v1245 = vmul.f32 %v1241, %v550
    %v1246 = vmul.f32 %v1244, %v550
    %v1247 = vadd.f32 %v1245, 1e-05
    %v1248 = vadd.f32 %v1246, 1e-05
    %v1249 = vrsqrt.pop %v1247
    %v1250 = vmul.f32 %v1249, %v1247
    %v1251 = vmul.f32 %v1250, %v1249
    %v1252 = vmul.f32 0.5, %v1251
    %v1253 = vsub.f32 1.5, %v1252
    %v1254 = vmul.f32 %v1249, %v1253
    %vm1255 = vweird.f32 %v1247
    %vm1256 = vweird.f32 %v1249
    %vm1257 = vmor %vm1255, %vm1256
    %v1258 = vsel %vm1257, %v1249, %v1254
    %v1259 = vrsqrt.pop %v1248
    %v1260 = vmul.f32 %v1259, %v1248
    %v1261 = vmul.f32 %v1260, %v1259
    %v1262 = vmul.f32 0.5, %v1261
    %v1263 = vsub.f32 1.5, %v1262
    %v1264 = vmul.f32 %v1259, %v1263
    %vm1265 = vweird.f32 %v1248
    %vm1266 = vweird.f32 %v1259
    %vm1267 = vmor %vm1265, %vm1266
    %v1268 = vsel %vm1267, %v1259, %v1264
    %v1269 = vmul.f32 %v1235, %v1258
    %v1270 = vmul.f32 %v1236, %v1268
    %s1271 = scalar_lea.vmem %s6, 1
    %v1272 = vld [vmem:[%s1271] sm:$0x1]
    %v1274 = vperm.slane %v1272, 0
    %v1276 = vmul.f32 %v1269, %v1274
    %v1277 = vmul.f32 %v1270, %v1274
    %s1278 = scalar_lea.vmem %s7, 1
    %v1279 = vld [vmem:[%s1278] sm:$0x1]
    %v1281 = vperm.slane %v1279, 0
    %v1283 = vadd.f32 %v1276, %v1281
    %v1284 = vadd.f32 %v1277, %v1281
    %v1285 = vpack.c.bf16 %v1284, %v1283
    %s1286 = scalar_lea.vmem %s8, 20
    %v1287 = vld [vmem:[%s1286] sm:$0xf]
    %v1288 = vld [vmem:[%s1286 + $0x4] sm:$0xf]
    %v1289 = vld [vmem:[%s1286 + $0x8] sm:$0xf]
    %v1290 = vld [vmem:[%s1286 + $0xc] sm:$0xf]
    %v1291 = vld [vmem:[%s1286 + $0x10] sm:$0x1]
    %s1292 = scalar_lea.vmem %s9, 1
    %v1293 = vld [vmem:[%s1292] sm:$0x1]
    %v1295 = vperm.slane %v1293, 0
    %v1302 = vunpack.c.l.b16 %v1287
    %v1303 = vunpack.c.l.b16 %v1288
    %v1304 = vunpack.c.l.b16 %v1289
    %v1305 = vunpack.c.l.b16 %v1290
    %v1306 = vunpack.c.l.b16 %v1291
    %v1307 = vpack.c.b16 %v1303, %v1302
    %v1308 = vpack.c.b16 %v1305, %v1304
    %v1309 = vpack.c.b16 %v1306, %v1306
    %v1313 = vsel %vm93, %v1285, 0
    %v1316 = vand.u32 %v1309, %v99
    %1318 = vmatpush.bf16.msra.mxu0 0
    %1319 = vmatpush.bf16.msra.mxu0 0
    %1320 = vmatpush.bf16.msra.mxu0 0
    %1321 = vmatpush.bf16.msra.mxu0 0
    %1322 = vmatpush.bf16.msra.mxu0 0
    %1323 = vmatpush.bf16.msra.mxu0 %v1316
    %1324 = vmatpush.bf16.msra.mxu0 %v1308
    %1325 = vmatpush.bf16.msra.mxu0 %v1307
    %1326 = vmatmul.bf16.gmra.mxu0 %v1313
    %v1327 = vpop.f32.mrf.mxu0
    %v1328 = vadd.f32 %v1295, %v1327
    %v1329 = vpop.f32.mrf.mxu0
    %v1330 = vadd.f32 %v1295, %v1329
    %1331 = vdwg.mxu0
    %v1332 = vmax.f32 %v1328, 0.0
    %v1333 = vmax.f32 %v1330, 0.0
    %v1334 = vpack.c.bf16 %v1333, %v1332
    %s1335 = scalar_lea.vmem %s10, 32
    %v1336 = vld [vmem:[%s1335] sm:$0xf]
    %v1337 = vld [vmem:[%s1335 + $0x4] sm:$0xf]
    %v1338 = vld [vmem:[%s1335 + $0x8] sm:$0xf]
    %v1339 = vld [vmem:[%s1335 + $0xc] sm:$0xf]
    %v1340 = vld [vmem:[%s1335 + $0x10] sm:$0xf]
    %v1341 = vld [vmem:[%s1335 + $0x14] sm:$0xf]
    %v1342 = vld [vmem:[%s1335 + $0x18] sm:$0xf]
    %v1343 = vld [vmem:[%s1335 + $0x1c] sm:$0xf]
    %s1344 = scalar_lea.vmem %s11, 1
    %v1345 = vld [vmem:[%s1344] sm:$0x1]
    %v1347 = vperm.slane %v1345, 0
    %v1357 = vunpack.c.l.b16 %v1336
    %v1358 = vunpack.c.l.b16 %v1337
    %v1359 = vunpack.c.l.b16 %v1338
    %v1360 = vunpack.c.l.b16 %v1339
    %v1361 = vunpack.c.l.b16 %v1340
    %v1362 = vunpack.c.l.b16 %v1341
    %v1363 = vunpack.c.l.b16 %v1342
    %v1364 = vunpack.c.l.b16 %v1343
    %v1365 = vpack.c.b16 %v1358, %v1357
    %v1366 = vpack.c.b16 %v1360, %v1359
    %v1367 = vpack.c.b16 %v1362, %v1361
    %v1368 = vpack.c.b16 %v1364, %v1363
    %v1374 = vsel %vm685, %v1334, 0
    %1376 = vmatpush.bf16.msra.mxu0 0
    %1377 = vmatpush.bf16.msra.mxu0 0
    %1378 = vmatpush.bf16.msra.mxu0 0
    %1379 = vmatpush.bf16.msra.mxu0 0
    %1380 = vmatpush.bf16.msra.mxu0 %v1368
    %1381 = vmatpush.bf16.msra.mxu0 %v1367
    %1382 = vmatpush.bf16.msra.mxu0 %v1366
    %1383 = vmatpush.bf16.msra.mxu0 %v1365
    %1384 = vmatmul.bf16.gmra.mxu0 %v1374
    %v1385 = vpop.f32.mrf.mxu0
    %v1386 = vadd.f32 %v1347, %v1385
    %v1387 = vpop.f32.mrf.mxu0
    %v1388 = vadd.f32 %v1347, %v1387
    %1389 = vdwg.mxu0
    %v1390 = vadd.f32 %v1283, %v1386
    %v1391 = vadd.f32 %v1284, %v1388
    %v1392 = vsel %vm93, %v1390, 0.0
    %1393 = vadd.xlane.f32.xlu0 %v1392
    %v1394 = vpop.xlane.xlu0 %1393
    %v1395 = vsel %vm93, %v1391, 0.0
    %1396 = vadd.xlane.f32.xlu0 %v1395
    %v1397 = vpop.xlane.xlu0 %1396
    %v1398 = vmul.f32 %v1394, %v550
    %v1399 = vmul.f32 %v1397, %v550
    %v1400 = vsub.f32 %v1390, %v1398
    %v1401 = vsub.f32 %v1391, %v1399
    %v1402 = vmul.f32 %v1400, %v1400
    %v1403 = vmul.f32 %v1401, %v1401
    %v1404 = vsel %vm93, %v1402, 0.0
    %1405 = vadd.xlane.f32.xlu0 %v1404
    %v1406 = vpop.xlane.xlu0 %1405
    %v1407 = vsel %vm93, %v1403, 0.0
    %1408 = vadd.xlane.f32.xlu0 %v1407
    %v1409 = vpop.xlane.xlu0 %1408
    %v1410 = vmul.f32 %v1406, %v550
    %v1411 = vmul.f32 %v1409, %v550
    %v1412 = vadd.f32 %v1410, 1e-05
    %v1413 = vadd.f32 %v1411, 1e-05
    %v1414 = vrsqrt.pop %v1412
    %v1415 = vmul.f32 %v1414, %v1412
    %v1416 = vmul.f32 %v1415, %v1414
    %v1417 = vmul.f32 0.5, %v1416
    %v1418 = vsub.f32 1.5, %v1417
    %v1419 = vmul.f32 %v1414, %v1418
    %vm1420 = vweird.f32 %v1412
    %vm1421 = vweird.f32 %v1414
    %vm1422 = vmor %vm1420, %vm1421
    %v1423 = vsel %vm1422, %v1414, %v1419
    %v1424 = vrsqrt.pop %v1413
    %v1425 = vmul.f32 %v1424, %v1413
    %v1426 = vmul.f32 %v1425, %v1424
    %v1427 = vmul.f32 0.5, %v1426
    %v1428 = vsub.f32 1.5, %v1427
    %v1429 = vmul.f32 %v1424, %v1428
    %vm1430 = vweird.f32 %v1413
    %vm1431 = vweird.f32 %v1424
    %vm1432 = vmor %vm1430, %vm1431
    %v1433 = vsel %vm1432, %v1424, %v1429
    %v1434 = vmul.f32 %v1400, %v1423
    %v1435 = vmul.f32 %v1401, %v1433
    %s1436 = scalar_lea.vmem %s12, 1
    %v1437 = vld [vmem:[%s1436] sm:$0x1]
    %v1439 = vperm.slane %v1437, 0
    %v1441 = vmul.f32 %v1434, %v1439
    %v1442 = vmul.f32 %v1435, %v1439
    %s1443 = scalar_lea.vmem %s13, 1
    %v1444 = vld [vmem:[%s1443] sm:$0x1]
    %v1446 = vperm.slane %v1444, 0
    %v1448 = vadd.f32 %v1441, %v1446
    %v1449 = vadd.f32 %v1442, %v1446
    %v1450 = vpack.c.bf16 %v1449, %v1448
    %v1451 = vld [vmem:[%s14] sm:$0xf]
    %v1452 = vld [vmem:[%s14 + $0x4] sm:$0xf]
    %v1453 = vld [vmem:[%s14 + $0x8] sm:$0xf]
    %v1454 = vld [vmem:[%s14 + $0xc] sm:$0xf]
    %v1455 = vld [vmem:[%s14 + $0x10] sm:$0x1]
    %v1456 = vld [vmem:[%s15] sm:$0x1]
    %v1458 = vperm.slane %v1456, 0
    %v1465 = vunpack.c.l.b16 %v1451
    %v1466 = vunpack.c.l.b16 %v1452
    %v1467 = vunpack.c.l.b16 %v1453
    %v1468 = vunpack.c.l.b16 %v1454
    %v1469 = vunpack.c.l.b16 %v1455
    %v1470 = vpack.c.b16 %v1466, %v1465
    %v1471 = vpack.c.b16 %v1468, %v1467
    %v1472 = vpack.c.b16 %v1469, %v1469
    %v1476 = vsel %vm93, %v1450, 0
    %v1479 = vand.u32 %v1472, %v99
    %1481 = vmatpush.bf16.msra.mxu0 0
    %1482 = vmatpush.bf16.msra.mxu0 0
    %1483 = vmatpush.bf16.msra.mxu0 0
    %1484 = vmatpush.bf16.msra.mxu0 0
    %1485 = vmatpush.bf16.msra.mxu0 0
    %1486 = vmatpush.bf16.msra.mxu0 %v1479
    %1487 = vmatpush.bf16.msra.mxu0 %v1471
    %1488 = vmatpush.bf16.msra.mxu0 %v1470
    %1489 = vmatmul.bf16.gmra.mxu0 %v1476
    %v1490 = vpop.f32.mrf.mxu0
    %v1491 = vadd.f32 %v1458, %v1490
    %v1492 = vpop.f32.mrf.mxu0
    %v1493 = vadd.f32 %v1458, %v1492
    %1494 = vdwg.mxu0
    %1495 = vst.msk [vmem:[#allocation2] sm:$0xff] %vm93, %v1491
    %1496 = vst.msk [vmem:[#allocation2 + $0x8] sm:$0xff] %vm93, %v1493
    // Predicated region
    $region66: #{tpu_custom_call.1} parent=1 // pred_check
      _
    $region67: #{tpu_custom_call.1} parent=1 // pred_check_branch
      %1498 = sbr.rel (0) target = $region69
    $region68: #{tpu_custom_call.1} parent=1 // pred_region
      %1500 = vsyncadd [#allocation3], 0
      %s1501 = sshll.u32 [#allocation2], 4
      %s1502 = int_to_ptr.vmem [resolvable:$true] %s1501
      %s1503 = sshll.u32 %s16, 4
      %s1504 = int_to_ptr.hbm [resolvable:$true] %s1503
      %1509 = dma.vmem_to_hbm [thread:$0]  %s1502, 256, %s1504, [#allocation3], 128, 128, 8
    $region69: #{tpu_custom_call.1} parent=1 // pred_fallthru
      _
    // Predicated region
    $region70: #{tpu_custom_call.1} parent=1 // pred_check
      _
    $region71: #{tpu_custom_call.1} parent=1 // pred_check_branch
      %1511 = sbr.rel (0) target = $region73
    $region72: #{tpu_custom_call.1} parent=1 // pred_region
      %1513 = dma.done [#allocation3], 256
    $region73: #{tpu_custom_call.1} parent=1 // pred_fallthru
      _
    %1514 = vsyncpa [#allocation3], 1

</llo_original>
